<compile_context>
chip_gen: v6e
topology: v6e:2x2x1
jax: 0.10.0
libtpu: 0.0.40
codegen_flags: <defaults>
</compile_context>

<pallas_src>
import functools

import jax
import jax.numpy as jnp
from jax.experimental import pallas as pl
from jax.experimental.pallas import tpu as pltpu


def _scale_up_kernel(x_ref, o_ref, *, scale: int):
    """x_ref: (B, H, W)  ->  o_ref: (B, H, scale*scale*W).

    Per plane, the row-major output (s*H, s*W) equals the view (H, s*s*W) with
    trailing index t = dh*(s*W) + w*s + dw, so:
      o[b, h, dh*(s*W) + w*s + dw] = x[b, h, w]
    """
    x = x_ref[...]                                   # (B, H, W)
    B, H, W = x.shape
    s = scale
    # dw duplication: lane interleave W -> s*W  (yw[..., w*s + dw] = x[..., w]).
    yw = jnp.broadcast_to(x[..., None], (B, H, W, s)).reshape(B, H, W * s)
    # dh duplication: s dense copies side by side along the lane axis (static slices),
    # instead of materializing and reshaping a (H, s, W, s) intermediate.
    sW = s * W
    for dh in range(s):
        o_ref[:, :, dh * sW:(dh + 1) * sW] = yw


def _pick_planes_per_block(num_planes: int, plane_pair_bytes: int,
                           target_bytes: int = 4 << 20) -> int:
    """Largest divisor of num_planes whose (in+out) block stays ~<= target_bytes,
    while keeping >= 2 grid steps (megacore on v7x)."""
    if num_planes <= 1:
        return max(num_planes, 1)
    b = max(1, min(target_bytes // max(plane_pair_bytes, 1), num_planes // 2))
    b = int(b)
    while num_planes % b:
        b -= 1
    return b


def scale_up(x: jnp.ndarray, scale_factor: int = 2, mode: str = "nearest") -> jnp.ndarray:
    """Nearest-neighbor upsampling of an NCHW tensor by an integer scale_factor."""
    # TODO(synk): only 'nearest' mode (the module default) is implemented; other
    # interpolation modes (e.g. bilinear) are not translated.
    assert mode == "nearest", "only nearest-neighbor upsampling is implemented"
    N, C, H, W = x.shape
    s = int(scale_factor)
    P = N * C

    itemsize = jnp.dtype(x.dtype).itemsize
    plane_pair_bytes = H * W * itemsize * (1 + s * s)  # one input plane + one output plane
    B = _pick_planes_per_block(P, plane_pair_bytes)
    grid = (P // B,)

    x3 = x.reshape(P, H, W)  # free view

    out_flat = pl.pallas_call(
        functools.partial(_scale_up_kernel, scale=s),
        out_shape=jax.ShapeDtypeStruct((P, H, s * s * W), x.dtype),
        grid=grid,
        in_specs=[pl.BlockSpec((B, H, W), lambda i: (i, 0, 0))],
        out_specs=pl.BlockSpec((B, H, s * s * W), lambda i: (i, 0, 0)),
        compiler_params=pltpu.CompilerParams(
            dimension_semantics=("parallel",),
            vmem_limit_bytes=32 * 1024 * 1024,
        ),
    )(x3)

    # (P, H, s*s*W) row-major is bit-identical to (N, C, s*H, s*W): free view.
    return out_flat.reshape(N, C, s * H, s * W)


if __name__ == "__main__":
    key = jax.random.PRNGKey(0)
    # Small NCHW shapes consistent with the module's conv-style input.
    N, C, H, W = 2, 4, 16, 16
    x = jax.random.normal(key, (N, C, H, W), dtype=jnp.float32)

    y = scale_up(x, scale_factor=2)
    y = jax.block_until_ready(y)

    # Reference: nearest-neighbor upsample semantics (out[i, j] = x[i // 2, j // 2]).
    ref = jnp.repeat(jnp.repeat(x, 2, axis=2), 2, axis=3)
    assert y.shape == (N, C, 2 * H, 2 * W), y.shape
    assert y.dtype == x.dtype
    assert bool(jnp.array_equal(y, ref)), "mismatch vs nearest-neighbor reference"

    print("KERNEL_OK")
</pallas_src>

<mosaic_0001>
module attributes {stable_mosaic.version = 11 : i64} {
  func.func @_scale_up_kernel(%arg0: i32, %arg1: memref<4x16x16xf32, #tpu.memory_space<vmem>>, %arg2: memref<4x16x64xf32, #tpu.memory_space<vmem>>) attributes {dimension_semantics = [#tpu.dimension_semantics<parallel>], iteration_bounds = array<i64: 2>, scalar_prefetch = 0 : i64, scratch_operands = 0 : i64, tpu.core_type = #tpu.core_type<tc>, window_params = [{transform_indices = @transform_0, window_bounds = array<i64: 4, 16, 16>}, {transform_indices = @transform_1, window_bounds = array<i64: 4, 16, 64>}]} {
    %c0 = arith.constant 0 : index
    %c0_0 = arith.constant 0 : index
    %c0_1 = arith.constant 0 : index
    %0 = vector.load %arg1[%c0, %c0_0, %c0_1] : memref<4x16x16xf32, #tpu.memory_space<vmem>>, vector<4x16x16xf32>
    %1 = vector.shape_cast %0 : vector<4x16x16xf32> to vector<4x16x16x1xf32>
    %2 = vector.shape_cast %1 : vector<4x16x16x1xf32> to vector<4x16x16x1xf32>
    %3 = vector.broadcast %2 : vector<4x16x16x1xf32> to vector<4x16x16x2xf32>
    %4 = vector.shape_cast %3 : vector<4x16x16x2xf32> to vector<4x16x32xf32>
    %c0_2 = arith.constant 0 : index
    %c0_3 = arith.constant 0 : index
    %c0_4 = arith.constant 0 : index
    %5 = vector.load %arg2[%c0_2, %c0_3, %c0_4] : memref<4x16x64xf32, #tpu.memory_space<vmem>>, vector<4x16x32xf32>
    tpu.vector_store %arg2[%c0_2, %c0_3, %c0_4], %4 {strides = array<i32>} : memref<4x16x64xf32, #tpu.memory_space<vmem>>, vector<4x16x32xf32>,
    %c0_5 = arith.constant 0 : index
    %c0_6 = arith.constant 0 : index
    %c32 = arith.constant 32 : index
    %6 = vector.load %arg2[%c0_5, %c0_6, %c32] : memref<4x16x64xf32, #tpu.memory_space<vmem>>, vector<4x16x32xf32>
    tpu.vector_store %arg2[%c0_5, %c0_6, %c32], %4 {strides = array<i32>} : memref<4x16x64xf32, #tpu.memory_space<vmem>>, vector<4x16x32xf32>,
    return
  }
  func.func @transform_0(%arg0: i32) -> (i32, i32, i32) {
    %c0_i32 = arith.constant 0 : i32
    %c0_i32_0 = arith.constant 0 : i32
    %c0_i32_1 = arith.constant 0 : i32
    return %arg0, %c0_i32, %c0_i32_0 : i32, i32, i32
  }
  func.func @transform_1(%arg0: i32) -> (i32, i32, i32) {
    %c0_i32 = arith.constant 0 : i32
    %c0_i32_0 = arith.constant 0 : i32
    %c0_i32_1 = arith.constant 0 : i32
    return %arg0, %c0_i32, %c0_i32_0 : i32, i32, i32
  }
}

</mosaic_0001>

<llo_original>
// kernel: tpu_custom_call.1
$region0: #{tpu_custom_call.1}
  #allocation0 [shape = 'u32[]', space=smem, size = 0x4, offset = 0x4, fixed_abs, tag = 'smem constant byte address 0x4 - core index']
  #allocation1 [shape = 'u32[144,128]{1,0:T(1,128)}', space=vmem, size = 0x12000, scoped, tag = 'internal scratch']
  %s0 = inlined_call_operand.hbm [shape: f32[8,16,16], index: 0, kind: input, shape index: {}]
  %s1 = inlined_call_operand.hbm [shape: f32[8,16,64], index: 1, kind: output, shape index: {}]
  %s2 = sld [smem:[#allocation0]]
  $region41: #{tpu_custom_call.1} parent=0
    _
  %s4 = ssub.s32 1, %s2
  %s5 = scalar_select 0, %s4, %s2
  $region1: #{tpu_custom_call.1} parent=0
    #allocation2 [shape = 'u8[65536]{0}', space=vmem, size = 0x10000, scoped, tag = 'input window, operand 0']
    #allocation3 [shape = 's32[2]{0}', space=sflag, size = 0x8, scoped, tag = 'scoped memory for tpu_custom_call.1']
    #allocation4 [shape = 's32[2]{0}', space=sflag, size = 0x8, scoped, tag = 'scoped memory for tpu_custom_call.1']
    #allocation5 [shape = 'u8[65536]{0}', space=vmem, size = 0x10000, scoped, tag = 'output window, operand 0']
    %6 = vsyncpa [#allocation3], 0
    %s7 = scalar_lea.sflag [#allocation3], 1
    %8 = vsyncpa %s7, 0
    %9 = vsyncpa [#allocation4], 0
    %s10 = scalar_lea.sflag [#allocation4], 1
    %11 = vsyncpa %s10, 0
    loop: start=0, step=1, limit=4
    $region2: #{tpu_custom_call.1} parent=1 // loop_pre_header
      _
    $region3: #{tpu_custom_call.1} parent=1 // loop_header
      %s13 = sphi 0, %s17
      %p14 = scmp.ge.s32.totalorder %s13, 4
      %s23 = sphi 0, %s25
      %s26 = sphi 0, %s23
      %s27 = sphi 0, %s26
      %s43 = sphi 0, %s27
      %s49 = sphi 0, %s51
      %s52 = sphi 0, %s49
      %s53 = sphi 0, %s52
      %s69 = sphi 0, %s53
    $region4: #{tpu_custom_call.1} parent=1 // loop_header_branch
      %16 = sbr.rel (%p14) target = $region8
    $region5: #{tpu_custom_call.1} parent=1 // loop_body
      %s18 = ssub.s32 %s13, 1
      %s19 = ssub.s32 %s13, 2
      %s20 = sadd.s32 %s13, 1
      %s21 = ssub.s32 %s13, %s20
      %p22 = scmp.eq.s32.totalorder %s21, 0
      %s24 = sadd.s32 %s23, 1
      %s25 = scalar_select %p22, %s23, %s24
      %p28 = pneg %p22
      %p29 = scmp.eq.s32.totalorder %s13, 1
      %p30 = por %p28, %p29
      %p31 = scmp.ne.s32.totalorder %s23, %s26
      %p32 = scmp.eq.s32.totalorder %s13, 0
      %p33 = por %p31, %p32
      %p34 = scmp.ne.s32.totalorder %s23, %s26
      %p35 = scmp.eq.s32.totalorder %s18, 1
      %p36 = por %p34, %p35
      %p37 = scmp.ne.s32.totalorder %s26, %s27
      %p38 = scmp.eq.s32.totalorder %s18, 0
      %p39 = por %p37, %p38
      %p40 = scmp.ne.s32.totalorder %s26, %s27
      %p41 = scmp.eq.s32.totalorder %s19, 1
      %p42 = por %p40, %p41
      %p44 = scmp.ne.s32.totalorder %s27, %s43
      %p45 = scmp.eq.s32.totalorder %s19, 0
      %p46 = por %p44, %p45
      %s47 = ssub.s32 %s13, %s20
      %p48 = scmp.eq.s32.totalorder %s47, 0
      %s50 = sadd.s32 %s49, 1
      %s51 = scalar_select %p48, %s49, %s50
      %p54 = pneg %p48
      %p55 = scmp.eq.s32.totalorder %s13, 1
      %p56 = por %p54, %p55
      %p57 = scmp.ne.s32.totalorder %s49, %s52
      %p58 = scmp.eq.s32.totalorder %s13, 0
      %p59 = por %p57, %p58
      %p60 = scmp.ne.s32.totalorder %s49, %s52
      %p61 = scmp.eq.s32.totalorder %s18, 1
      %p62 = por %p60, %p61
      %p63 = scmp.ne.s32.totalorder %s52, %s53
      %p64 = scmp.eq.s32.totalorder %s18, 0
      %p65 = por %p63, %p64
      %p66 = scmp.ne.s32.totalorder %s52, %s53
      %p67 = scmp.eq.s32.totalorder %s19, 1
      %p68 = por %p66, %p67
      %p70 = scmp.ne.s32.totalorder %s53, %s69
      %p71 = scmp.eq.s32.totalorder %s19, 0
      %p72 = por %p70, %p71
      %p73 = scmp.le.s32.totalorder 1, %s13
      %p74 = scmp.lt.s32.totalorder %s13, 3
      %p75 = pnand %p73, %p74
      %p76 = pneg %p75
      // Predicated region
      $region9: #{tpu_custom_call.1} parent=5 // pred_check
        _
      $region10: #{tpu_custom_call.1} parent=5 // pred_check_branch
        %78 = sbr.rel (%p75) target = $region12
      $region11: #{tpu_custom_call.1} parent=5 // pred_region
        %s79 = ssub.s32 %s13, 1
      $region12: #{tpu_custom_call.1} parent=5 // pred_fallthru
        _
      %p80 = scmp.lt.s32.totalorder %s13, 2
      // Predicated region
      $region13: #{tpu_custom_call.1} parent=5 // pred_check
        %p81 = pneg %p80
      $region14: #{tpu_custom_call.1} parent=5 // pred_check_branch
        %83 = sbr.rel (%p81) target = $region16
      $region15: #{tpu_custom_call.1} parent=5 // pred_region
        // Predicated region
        $region17: #{tpu_custom_call.1} parent=15 // pred_check
          %p84 = pneg %p33
        $region18: #{tpu_custom_call.1} parent=15 // pred_check_branch
          %86 = sbr.rel (%p84) target = $region20
        $region19: #{tpu_custom_call.1} parent=15 // pred_region
          %s87 = sand.u32 %s23, 1
          %s88 = scalar_lea.sflag [#allocation3], %s87
          %s89 = sand.u32 %s23, 1
          %s90 = smul.addr %s89, 64
          %s91 = scalar_lea.vmem [#allocation2], %s90
          %s92 = smul.u32 4, %s13
          %s94 = ssub.s32 1024, 1024
          %95 = vsyncadd %s88, %s94
          %s96 = smul.addr %s92, 2
          %s97 = smul.addr %s96, 128
          %s98 = scalar_lea.hbm %s0, %s97
          %s99 = sshll.u32 %s91, 4
          %s100 = int_to_ptr.vmem [resolvable:$true] %s99
          %105 = dma.hbm_to_vmem [thread:$0]  %s98, 1024, %s100, %s88, 128, 128, 8
        $region20: #{tpu_custom_call.1} parent=15 // pred_fallthru
          _
      $region16: #{tpu_custom_call.1} parent=5 // pred_fallthru
        _
      %p106 = scmp.le.s32.totalorder 1, %s13
      %p107 = scmp.lt.s32.totalorder %s13, 3
      %p108 = pnand %p106, %p107
      %p109 = pneg %p108
      // Predicated region
      $region21: #{tpu_custom_call.1} parent=5 // pred_check
        _
      $region22: #{tpu_custom_call.1} parent=5 // pred_check_branch
        %111 = sbr.rel (%p108) target = $region24
      $region23: #{tpu_custom_call.1} parent=5 // pred_region
        %s112 = ssub.s32 %s13, 1
        %s113 = sand.u32 %s26, 1
        %s114 = scalar_lea.sflag [#allocation3], %s113
        %s115 = sand.u32 %s26, 1
        %s116 = smul.addr %s115, 64
        %s117 = scalar_lea.vmem [#allocation2], %s116
        // Predicated region
        $region25: #{tpu_custom_call.1} parent=23 // pred_check
          %p118 = pneg %p39
        $region26: #{tpu_custom_call.1} parent=23 // pred_check_branch
          %120 = sbr.rel (%p118) target = $region28
        $region27: #{tpu_custom_call.1} parent=23 // pred_region
          %121 = dma.done %s114, 1024
        $region28: #{tpu_custom_call.1} parent=23 // pred_fallthru
          _
        %s122 = sand.u32 %s26, 1
        %s123 = scalar_lea.sflag [#allocation3], %s122
        %s124 = sand.u32 %s26, 1
        %s125 = smul.addr %s124, 64
        %s126 = scalar_lea.vmem [#allocation2], %s125
        %p127 = pneg %p39
        %p128 = pneg %p36
        %p129 = pneg %p65
        %p130 = pneg %p62
        %s131 = sand.u32 %s52, 1
        %s132 = scalar_lea.sflag [#allocation4], %s131
        %s133 = sand.u32 %s52, 1
        %s134 = smul.addr %s133, 64
        %s135 = scalar_lea.vmem [#allocation5], %s134
        %s136 = smul.u32 4, %s18
        %s137 = smul.u32 4, %s18
        %v138 = vld [vmem:[%s117] sm:$0xff]
        %v139 = vld [vmem:[%s117 + $0x8] sm:$0xff]
        %v140 = vld [vmem:[%s117 + $0x10] sm:$0xff]
        %v141 = vld [vmem:[%s117 + $0x18] sm:$0xff]
        %v142 = vld [vmem:[%s117 + $0x20] sm:$0xff]
        %v143 = vld [vmem:[%s117 + $0x28] sm:$0xff]
        %v144 = vld [vmem:[%s117 + $0x30] sm:$0xff]
        %v145 = vld [vmem:[%s117 + $0x38] sm:$0xff]
        %v146 = vlaneseq
        %v147 = vshrl.u32 %v146, 7
        %v148 = vsub.s32 0, %v147
        %v149 = vrot.slane %v138, %v148
        %151 = vbcast.lane.b32.xlu0 %v149, 256
        %v152 = vpop.permute.xlu0 %151
        %s154 = sor.u32 256, 8
        %155 = vbcast.lane.b32.xlu0 %v149, %s154
        %v156 = vpop.permute.xlu0 %155
        %v157 = vlaneseq
        %v158 = vshrl.u32 %v157, 7
        %v159 = vsub.s32 1, %v158
        %v160 = vrot.slane %v138, %v159
        %162 = vbcast.lane.b32.xlu0 %v160, 256
        %v163 = vpop.permute.xlu0 %162
        %s165 = sor.u32 256, 8
        %166 = vbcast.lane.b32.xlu0 %v160, %s165
        %v167 = vpop.permute.xlu0 %166
        %v168 = vlaneseq
        %v169 = vshrl.u32 %v168, 7
        %v170 = vsub.s32 2, %v169
        %v171 = vrot.slane %v138, %v170
        %173 = vbcast.lane.b32.xlu0 %v171, 256
        %v174 = vpop.permute.xlu0 %173
        %s176 = sor.u32 256, 8
        %177 = vbcast.lane.b32.xlu0 %v171, %s176
        %v178 = vpop.permute.xlu0 %177
        %v179 = vlaneseq
        %v180 = vshrl.u32 %v179, 7
        %v181 = vsub.s32 3, %v180
        %v182 = vrot.slane %v138, %v181
        %184 = vbcast.lane.b32.xlu0 %v182, 256
        %v185 = vpop.permute.xlu0 %184
        %s187 = sor.u32 256, 8
        %188 = vbcast.lane.b32.xlu0 %v182, %s187
        %v189 = vpop.permute.xlu0 %188
        %v190 = vlaneseq
        %v191 = vshrl.u32 %v190, 7
        %v192 = vsub.s32 4, %v191
        %v193 = vrot.slane %v138, %v192
        %195 = vbcast.lane.b32.xlu0 %v193, 256
        %v196 = vpop.permute.xlu0 %195
        %s198 = sor.u32 256, 8
        %199 = vbcast.lane.b32.xlu0 %v193, %s198
        %v200 = vpop.permute.xlu0 %199
        %v201 = vlaneseq
        %v202 = vshrl.u32 %v201, 7
        %v203 = vsub.s32 5, %v202
        %v204 = vrot.slane %v138, %v203
        %206 = vbcast.lane.b32.xlu0 %v204, 256
        %v207 = vpop.permute.xlu0 %206
        %s209 = sor.u32 256, 8
        %210 = vbcast.lane.b32.xlu0 %v204, %s209
        %v211 = vpop.permute.xlu0 %210
        %v212 = vlaneseq
        %v213 = vshrl.u32 %v212, 7
        %v214 = vsub.s32 6, %v213
        %v215 = vrot.slane %v138, %v214
        %217 = vbcast.lane.b32.xlu0 %v215, 256
        %v218 = vpop.permute.xlu0 %217
        %s220 = sor.u32 256, 8
        %221 = vbcast.lane.b32.xlu0 %v215, %s220
        %v222 = vpop.permute.xlu0 %221
        %v223 = vlaneseq
        %v224 = vshrl.u32 %v223, 7
        %v225 = vsub.s32 7, %v224
        %v226 = vrot.slane %v138, %v225
        %228 = vbcast.lane.b32.xlu0 %v226, 256
        %v229 = vpop.permute.xlu0 %228
        %s231 = sor.u32 256, 8
        %232 = vbcast.lane.b32.xlu0 %v226, %s231
        %v233 = vpop.permute.xlu0 %232
        %v234 = vlaneseq
        %v235 = vshrl.u32 %v234, 7
        %v236 = vsub.s32 0, %v235
        %v237 = vrot.slane %v139, %v236
        %239 = vbcast.lane.b32.xlu0 %v237, 256
        %v240 = vpop.permute.xlu0 %239
        %s242 = sor.u32 256, 8
        %243 = vbcast.lane.b32.xlu0 %v237, %s242
        %v244 = vpop.permute.xlu0 %243
        %v245 = vlaneseq
        %v246 = vshrl.u32 %v245, 7
        %v247 = vsub.s32 1, %v246
        %v248 = vrot.slane %v139, %v247
        %250 = vbcast.lane.b32.xlu0 %v248, 256
        %v251 = vpop.permute.xlu0 %250
        %s253 = sor.u32 256, 8
        %254 = vbcast.lane.b32.xlu0 %v248, %s253
        %v255 = vpop.permute.xlu0 %254
        %v256 = vlaneseq
        %v257 = vshrl.u32 %v256, 7
        %v258 = vsub.s32 2, %v257
        %v259 = vrot.slane %v139, %v258
        %261 = vbcast.lane.b32.xlu0 %v259, 256
        %v262 = vpop.permute.xlu0 %261
        %s264 = sor.u32 256, 8
        %265 = vbcast.lane.b32.xlu0 %v259, %s264
        %v266 = vpop.permute.xlu0 %265
        %v267 = vlaneseq
        %v268 = vshrl.u32 %v267, 7
        %v269 = vsub.s32 3, %v268
        %v270 = vrot.slane %v139, %v269
        %272 = vbcast.lane.b32.xlu0 %v270, 256
        %v273 = vpop.permute.xlu0 %272
        %s275 = sor.u32 256, 8
        %276 = vbcast.lane.b32.xlu0 %v270, %s275
        %v277 = vpop.permute.xlu0 %276
        %v278 = vlaneseq
        %v279 = vshrl.u32 %v278, 7
        %v280 = vsub.s32 4, %v279
        %v281 = vrot.slane %v139, %v280
        %283 = vbcast.lane.b32.xlu0 %v281, 256
        %v284 = vpop.permute.xlu0 %283
        %s286 = sor.u32 256, 8
        %287 = vbcast.lane.b32.xlu0 %v281, %s286
        %v288 = vpop.permute.xlu0 %287
        %v289 = vlaneseq
        %v290 = vshrl.u32 %v289, 7
        %v291 = vsub.s32 5, %v290
        %v292 = vrot.slane %v139, %v291
        %294 = vbcast.lane.b32.xlu0 %v292, 256
        %v295 = vpop.permute.xlu0 %294
        %s297 = sor.u32 256, 8
        %298 = vbcast.lane.b32.xlu0 %v292, %s297
        %v299 = vpop.permute.xlu0 %298
        %v300 = vlaneseq
        %v301 = vshrl.u32 %v300, 7
        %v302 = vsub.s32 6, %v301
        %v303 = vrot.slane %v139, %v302
        %305 = vbcast.lane.b32.xlu0 %v303, 256
        %v306 = vpop.permute.xlu0 %305
        %s308 = sor.u32 256, 8
        %309 = vbcast.lane.b32.xlu0 %v303, %s308
        %v310 = vpop.permute.xlu0 %309
        %v311 = vlaneseq
        %v312 = vshrl.u32 %v311, 7
        %v313 = vsub.s32 7, %v312
        %v314 = vrot.slane %v139, %v313
        %316 = vbcast.lane.b32.xlu0 %v314, 256
        %v317 = vpop.permute.xlu0 %316
        %s319 = sor.u32 256, 8
        %320 = vbcast.lane.b32.xlu0 %v314, %s319
        %v321 = vpop.permute.xlu0 %320
        %v322 = vlaneseq
        %v323 = vshrl.u32 %v322, 7
        %v324 = vsub.s32 0, %v323
        %v325 = vrot.slane %v140, %v324
        %327 = vbcast.lane.b32.xlu0 %v325, 256
        %v328 = vpop.permute.xlu0 %327
        %s330 = sor.u32 256, 8
        %331 = vbcast.lane.b32.xlu0 %v325, %s330
        %v332 = vpop.permute.xlu0 %331
        %v333 = vlaneseq
        %v334 = vshrl.u32 %v333, 7
        %v335 = vsub.s32 1, %v334
        %v336 = vrot.slane %v140, %v335
        %338 = vbcast.lane.b32.xlu0 %v336, 256
        %v339 = vpop.permute.xlu0 %338
        %s341 = sor.u32 256, 8
        %342 = vbcast.lane.b32.xlu0 %v336, %s341
        %v343 = vpop.permute.xlu0 %342
        %v344 = vlaneseq
        %v345 = vshrl.u32 %v344, 7
        %v346 = vsub.s32 2, %v345
        %v347 = vrot.slane %v140, %v346
        %349 = vbcast.lane.b32.xlu0 %v347, 256
        %v350 = vpop.permute.xlu0 %349
        %s352 = sor.u32 256, 8
        %353 = vbcast.lane.b32.xlu0 %v347, %s352
        %v354 = vpop.permute.xlu0 %353
        %v355 = vlaneseq
        %v356 = vshrl.u32 %v355, 7
        %v357 = vsub.s32 3, %v356
        %v358 = vrot.slane %v140, %v357
        %360 = vbcast.lane.b32.xlu0 %v358, 256
        %v361 = vpop.permute.xlu0 %360
        %s363 = sor.u32 256, 8
        %364 = vbcast.lane.b32.xlu0 %v358, %s363
        %v365 = vpop.permute.xlu0 %364
        %v366 = vlaneseq
        %v367 = vshrl.u32 %v366, 7
        %v368 = vsub.s32 4, %v367
        %v369 = vrot.slane %v140, %v368
        %371 = vbcast.lane.b32.xlu0 %v369, 256
        %v372 = vpop.permute.xlu0 %371
        %s374 = sor.u32 256, 8
        %375 = vbcast.lane.b32.xlu0 %v369, %s374
        %v376 = vpop.permute.xlu0 %375
        %v377 = vlaneseq
        %v378 = vshrl.u32 %v377, 7
        %v379 = vsub.s32 5, %v378
        %v380 = vrot.slane %v140, %v379
        %382 = vbcast.lane.b32.xlu0 %v380, 256
        %v383 = vpop.permute.xlu0 %382
        %s385 = sor.u32 256, 8
        %386 = vbcast.lane.b32.xlu0 %v380, %s385
        %v387 = vpop.permute.xlu0 %386
        %v388 = vlaneseq
        %v389 = vshrl.u32 %v388, 7
        %v390 = vsub.s32 6, %v389
        %v391 = vrot.slane %v140, %v390
        %393 = vbcast.lane.b32.xlu0 %v391, 256
        %v394 = vpop.permute.xlu0 %393
        %s396 = sor.u32 256, 8
        %397 = vbcast.lane.b32.xlu0 %v391, %s396
        %v398 = vpop.permute.xlu0 %397
        %v399 = vlaneseq
        %v400 = vshrl.u32 %v399, 7
        %v401 = vsub.s32 7, %v400
        %v402 = vrot.slane %v140, %v401
        %404 = vbcast.lane.b32.xlu0 %v402, 256
        %v405 = vpop.permute.xlu0 %404
        %s407 = sor.u32 256, 8
        %408 = vbcast.lane.b32.xlu0 %v402, %s407
        %v409 = vpop.permute.xlu0 %408
        %v410 = vlaneseq
        %v411 = vshrl.u32 %v410, 7
        %v412 = vsub.s32 0, %v411
        %v413 = vrot.slane %v141, %v412
        %415 = vbcast.lane.b32.xlu0 %v413, 256
        %v416 = vpop.permute.xlu0 %415
        %s418 = sor.u32 256, 8
        %419 = vbcast.lane.b32.xlu0 %v413, %s418
        %v420 = vpop.permute.xlu0 %419
        %v421 = vlaneseq
        %v422 = vshrl.u32 %v421, 7
        %v423 = vsub.s32 1, %v422
        %v424 = vrot.slane %v141, %v423
        %426 = vbcast.lane.b32.xlu0 %v424, 256
        %v427 = vpop.permute.xlu0 %426
        %s429 = sor.u32 256, 8
        %430 = vbcast.lane.b32.xlu0 %v424, %s429
        %v431 = vpop.permute.xlu0 %430
        %v432 = vlaneseq
        %v433 = vshrl.u32 %v432, 7
        %v434 = vsub.s32 2, %v433
        %v435 = vrot.slane %v141, %v434
        %437 = vbcast.lane.b32.xlu0 %v435, 256
        %v438 = vpop.permute.xlu0 %437
        %s440 = sor.u32 256, 8
        %441 = vbcast.lane.b32.xlu0 %v435, %s440
        %v442 = vpop.permute.xlu0 %441
        %v443 = vlaneseq
        %v444 = vshrl.u32 %v443, 7
        %v445 = vsub.s32 3, %v444
        %v446 = vrot.slane %v141, %v445
        %448 = vbcast.lane.b32.xlu0 %v446, 256
        %v449 = vpop.permute.xlu0 %448
        %s451 = sor.u32 256, 8
        %452 = vbcast.lane.b32.xlu0 %v446, %s451
        %v453 = vpop.permute.xlu0 %452
        %v454 = vlaneseq
        %v455 = vshrl.u32 %v454, 7
        %v456 = vsub.s32 4, %v455
        %v457 = vrot.slane %v141, %v456
        %459 = vbcast.lane.b32.xlu0 %v457, 256
        %v460 = vpop.permute.xlu0 %459
        %s462 = sor.u32 256, 8
        %463 = vbcast.lane.b32.xlu0 %v457, %s462
        %v464 = vpop.permute.xlu0 %463
        %v465 = vlaneseq
        %v466 = vshrl.u32 %v465, 7
        %v467 = vsub.s32 5, %v466
        %v468 = vrot.slane %v141, %v467
        %470 = vbcast.lane.b32.xlu0 %v468, 256
        %v471 = vpop.permute.xlu0 %470
        %s473 = sor.u32 256, 8
        %474 = vbcast.lane.b32.xlu0 %v468, %s473
        %v475 = vpop.permute.xlu0 %474
        %v476 = vlaneseq
        %v477 = vshrl.u32 %v476, 7
        %v478 = vsub.s32 6, %v477
        %v479 = vrot.slane %v141, %v478
        %481 = vbcast.lane.b32.xlu0 %v479, 256
        %v482 = vpop.permute.xlu0 %481
        %s484 = sor.u32 256, 8
        %485 = vbcast.lane.b32.xlu0 %v479, %s484
        %v486 = vpop.permute.xlu0 %485
        %v487 = vlaneseq
        %v488 = vshrl.u32 %v487, 7
        %v489 = vsub.s32 7, %v488
        %v490 = vrot.slane %v141, %v489
        %492 = vbcast.lane.b32.xlu0 %v490, 256
        %v493 = vpop.permute.xlu0 %492
        %s495 = sor.u32 256, 8
        %496 = vbcast.lane.b32.xlu0 %v490, %s495
        %v497 = vpop.permute.xlu0 %496
        %v498 = vlaneseq
        %v499 = vshrl.u32 %v498, 7
        %v500 = vsub.s32 0, %v499
        %v501 = vrot.slane %v142, %v500
        %503 = vbcast.lane.b32.xlu0 %v501, 256
        %v504 = vpop.permute.xlu0 %503
        %s506 = sor.u32 256, 8
        %507 = vbcast.lane.b32.xlu0 %v501, %s506
        %v508 = vpop.permute.xlu0 %507
        %v509 = vlaneseq
        %v510 = vshrl.u32 %v509, 7
        %v511 = vsub.s32 1, %v510
        %v512 = vrot.slane %v142, %v511
        %514 = vbcast.lane.b32.xlu0 %v512, 256
        %v515 = vpop.permute.xlu0 %514
        %s517 = sor.u32 256, 8
        %518 = vbcast.lane.b32.xlu0 %v512, %s517
        %v519 = vpop.permute.xlu0 %518
        %v520 = vlaneseq
        %v521 = vshrl.u32 %v520, 7
        %v522 = vsub.s32 2, %v521
        %v523 = vrot.slane %v142, %v522
        %525 = vbcast.lane.b32.xlu0 %v523, 256
        %v526 = vpop.permute.xlu0 %525
        %s528 = sor.u32 256, 8
        %529 = vbcast.lane.b32.xlu0 %v523, %s528
        %v530 = vpop.permute.xlu0 %529
        %v531 = vlaneseq
        %v532 = vshrl.u32 %v531, 7
        %v533 = vsub.s32 3, %v532
        %v534 = vrot.slane %v142, %v533
        %536 = vbcast.lane.b32.xlu0 %v534, 256
        %v537 = vpop.permute.xlu0 %536
        %s539 = sor.u32 256, 8
        %540 = vbcast.lane.b32.xlu0 %v534, %s539
        %v541 = vpop.permute.xlu0 %540
        %v542 = vlaneseq
        %v543 = vshrl.u32 %v542, 7
        %v544 = vsub.s32 4, %v543
        %v545 = vrot.slane %v142, %v544
        %547 = vbcast.lane.b32.xlu0 %v545, 256
        %v548 = vpop.permute.xlu0 %547
        %s550 = sor.u32 256, 8
        %551 = vbcast.lane.b32.xlu0 %v545, %s550
        %v552 = vpop.permute.xlu0 %551
        %v553 = vlaneseq
        %v554 = vshrl.u32 %v553, 7
        %v555 = vsub.s32 5, %v554
        %v556 = vrot.slane %v142, %v555
        %558 = vbcast.lane.b32.xlu0 %v556, 256
        %v559 = vpop.permute.xlu0 %558
        %s561 = sor.u32 256, 8
        %562 = vbcast.lane.b32.xlu0 %v556, %s561
        %v563 = vpop.permute.xlu0 %562
        %v564 = vlaneseq
        %v565 = vshrl.u32 %v564, 7
        %v566 = vsub.s32 6, %v565
        %v567 = vrot.slane %v142, %v566
        %569 = vbcast.lane.b32.xlu0 %v567, 256
        %v570 = vpop.permute.xlu0 %569
        %s572 = sor.u32 256, 8
        %573 = vbcast.lane.b32.xlu0 %v567, %s572
        %v574 = vpop.permute.xlu0 %573
        %v575 = vlaneseq
        %v576 = vshrl.u32 %v575, 7
        %v577 = vsub.s32 7, %v576
        %v578 = vrot.slane %v142, %v577
        %580 = vbcast.lane.b32.xlu0 %v578, 256
        %v581 = vpop.permute.xlu0 %580
        %s583 = sor.u32 256, 8
        %584 = vbcast.lane.b32.xlu0 %v578, %s583
        %v585 = vpop.permute.xlu0 %584
        %v586 = vlaneseq
        %v587 = vshrl.u32 %v586, 7
        %v588 = vsub.s32 0, %v587
        %v589 = vrot.slane %v143, %v588
        %591 = vbcast.lane.b32.xlu0 %v589, 256
        %v592 = vpop.permute.xlu0 %591
        %s594 = sor.u32 256, 8
        %595 = vbcast.lane.b32.xlu0 %v589, %s594
        %v596 = vpop.permute.xlu0 %595
        %v597 = vlaneseq
        %v598 = vshrl.u32 %v597, 7
        %v599 = vsub.s32 1, %v598
        %v600 = vrot.slane %v143, %v599
        %602 = vbcast.lane.b32.xlu0 %v600, 256
        %v603 = vpop.permute.xlu0 %602
        %s605 = sor.u32 256, 8
        %606 = vbcast.lane.b32.xlu0 %v600, %s605
        %v607 = vpop.permute.xlu0 %606
        %v608 = vlaneseq
        %v609 = vshrl.u32 %v608, 7
        %v610 = vsub.s32 2, %v609
        %v611 = vrot.slane %v143, %v610
        %613 = vbcast.lane.b32.xlu0 %v611, 256
        %v614 = vpop.permute.xlu0 %613
        %s616 = sor.u32 256, 8
        %617 = vbcast.lane.b32.xlu0 %v611, %s616
        %v618 = vpop.permute.xlu0 %617
        %v619 = vlaneseq
        %v620 = vshrl.u32 %v619, 7
        %v621 = vsub.s32 3, %v620
        %v622 = vrot.slane %v143, %v621
        %624 = vbcast.lane.b32.xlu0 %v622, 256
        %v625 = vpop.permute.xlu0 %624
        %s627 = sor.u32 256, 8
        %628 = vbcast.lane.b32.xlu0 %v622, %s627
        %v629 = vpop.permute.xlu0 %628
        %v630 = vlaneseq
        %v631 = vshrl.u32 %v630, 7
        %v632 = vsub.s32 4, %v631
        %v633 = vrot.slane %v143, %v632
        %635 = vbcast.lane.b32.xlu0 %v633, 256
        %v636 = vpop.permute.xlu0 %635
        %s638 = sor.u32 256, 8
        %639 = vbcast.lane.b32.xlu0 %v633, %s638
        %v640 = vpop.permute.xlu0 %639
        %v641 = vlaneseq
        %v642 = vshrl.u32 %v641, 7
        %v643 = vsub.s32 5, %v642
        %v644 = vrot.slane %v143, %v643
        %646 = vbcast.lane.b32.xlu0 %v644, 256
        %v647 = vpop.permute.xlu0 %646
        %s649 = sor.u32 256, 8
        %650 = vbcast.lane.b32.xlu0 %v644, %s649
        %v651 = vpop.permute.xlu0 %650
        %v652 = vlaneseq
        %v653 = vshrl.u32 %v652, 7
        %v654 = vsub.s32 6, %v653
        %v655 = vrot.slane %v143, %v654
        %657 = vbcast.lane.b32.xlu0 %v655, 256
        %v658 = vpop.permute.xlu0 %657
        %s660 = sor.u32 256, 8
        %661 = vbcast.lane.b32.xlu0 %v655, %s660
        %v662 = vpop.permute.xlu0 %661
        %v663 = vlaneseq
        %v664 = vshrl.u32 %v663, 7
        %v665 = vsub.s32 7, %v664
        %v666 = vrot.slane %v143, %v665
        %668 = vbcast.lane.b32.xlu0 %v666, 256
        %v669 = vpop.permute.xlu0 %668
        %s671 = sor.u32 256, 8
        %672 = vbcast.lane.b32.xlu0 %v666, %s671
        %v673 = vpop.permute.xlu0 %672
        %v674 = vlaneseq
        %v675 = vshrl.u32 %v674, 7
        %v676 = vsub.s32 0, %v675
        %v677 = vrot.slane %v144, %v676
        %679 = vbcast.lane.b32.xlu0 %v677, 256
        %v680 = vpop.permute.xlu0 %679
        %s682 = sor.u32 256, 8
        %683 = vbcast.lane.b32.xlu0 %v677, %s682
        %v684 = vpop.permute.xlu0 %683
        %v685 = vlaneseq
        %v686 = vshrl.u32 %v685, 7
        %v687 = vsub.s32 1, %v686
        %v688 = vrot.slane %v144, %v687
        %690 = vbcast.lane.b32.xlu0 %v688, 256
        %v691 = vpop.permute.xlu0 %690
        %s693 = sor.u32 256, 8
        %694 = vbcast.lane.b32.xlu0 %v688, %s693
        %v695 = vpop.permute.xlu0 %694
        %v696 = vlaneseq
        %v697 = vshrl.u32 %v696, 7
        %v698 = vsub.s32 2, %v697
        %v699 = vrot.slane %v144, %v698
        %701 = vbcast.lane.b32.xlu0 %v699, 256
        %v702 = vpop.permute.xlu0 %701
        %s704 = sor.u32 256, 8
        %705 = vbcast.lane.b32.xlu0 %v699, %s704
        %v706 = vpop.permute.xlu0 %705
        %v707 = vlaneseq
        %v708 = vshrl.u32 %v707, 7
        %v709 = vsub.s32 3, %v708
        %v710 = vrot.slane %v144, %v709
        %712 = vbcast.lane.b32.xlu0 %v710, 256
        %v713 = vpop.permute.xlu0 %712
        %s715 = sor.u32 256, 8
        %716 = vbcast.lane.b32.xlu0 %v710, %s715
        %v717 = vpop.permute.xlu0 %716
        %v718 = vlaneseq
        %v719 = vshrl.u32 %v718, 7
        %v720 = vsub.s32 4, %v719
        %v721 = vrot.slane %v144, %v720
        %723 = vbcast.lane.b32.xlu0 %v721, 256
        %v724 = vpop.permute.xlu0 %723
        %s726 = sor.u32 256, 8
        %727 = vbcast.lane.b32.xlu0 %v721, %s726
        %v728 = vpop.permute.xlu0 %727
        %v729 = vlaneseq
        %v730 = vshrl.u32 %v729, 7
        %v731 = vsub.s32 5, %v730
        %v732 = vrot.slane %v144, %v731
        %734 = vbcast.lane.b32.xlu0 %v732, 256
        %v735 = vpop.permute.xlu0 %734
        %s737 = sor.u32 256, 8
        %738 = vbcast.lane.b32.xlu0 %v732, %s737
        %v739 = vpop.permute.xlu0 %738
        %v740 = vlaneseq
        %v741 = vshrl.u32 %v740, 7
        %v742 = vsub.s32 6, %v741
        %v743 = vrot.slane %v144, %v742
        %745 = vbcast.lane.b32.xlu0 %v743, 256
        %v746 = vpop.permute.xlu0 %745
        %s748 = sor.u32 256, 8
        %749 = vbcast.lane.b32.xlu0 %v743, %s748
        %v750 = vpop.permute.xlu0 %749
        %v751 = vlaneseq
        %v752 = vshrl.u32 %v751, 7
        %v753 = vsub.s32 7, %v752
        %v754 = vrot.slane %v144, %v753
        %756 = vbcast.lane.b32.xlu0 %v754, 256
        %v757 = vpop.permute.xlu0 %756
        %s759 = sor.u32 256, 8
        %760 = vbcast.lane.b32.xlu0 %v754, %s759
        %v761 = vpop.permute.xlu0 %760
        %v762 = vlaneseq
        %v763 = vshrl.u32 %v762, 7
        %v764 = vsub.s32 0, %v763
        %v765 = vrot.slane %v145, %v764
        %767 = vbcast.lane.b32.xlu0 %v765, 256
        %v768 = vpop.permute.xlu0 %767
        %s770 = sor.u32 256, 8
        %771 = vbcast.lane.b32.xlu0 %v765, %s770
        %v772 = vpop.permute.xlu0 %771
        %v773 = vlaneseq
        %v774 = vshrl.u32 %v773, 7
        %v775 = vsub.s32 1, %v774
        %v776 = vrot.slane %v145, %v775
        %778 = vbcast.lane.b32.xlu0 %v776, 256
        %v779 = vpop.permute.xlu0 %778
        %s781 = sor.u32 256, 8
        %782 = vbcast.lane.b32.xlu0 %v776, %s781
        %v783 = vpop.permute.xlu0 %782
        %v784 = vlaneseq
        %v785 = vshrl.u32 %v784, 7
        %v786 = vsub.s32 2, %v785
        %v787 = vrot.slane %v145, %v786
        %789 = vbcast.lane.b32.xlu0 %v787, 256
        %v790 = vpop.permute.xlu0 %789
        %s792 = sor.u32 256, 8
        %793 = vbcast.lane.b32.xlu0 %v787, %s792
        %v794 = vpop.permute.xlu0 %793
        %v795 = vlaneseq
        %v796 = vshrl.u32 %v795, 7
        %v797 = vsub.s32 3, %v796
        %v798 = vrot.slane %v145, %v797
        %800 = vbcast.lane.b32.xlu0 %v798, 256
        %v801 = vpop.permute.xlu0 %800
        %s803 = sor.u32 256, 8
        %804 = vbcast.lane.b32.xlu0 %v798, %s803
        %v805 = vpop.permute.xlu0 %804
        %v806 = vlaneseq
        %v807 = vshrl.u32 %v806, 7
        %v808 = vsub.s32 4, %v807
        %v809 = vrot.slane %v145, %v808
        %811 = vbcast.lane.b32.xlu0 %v809, 256
        %v812 = vpop.permute.xlu0 %811
        %s814 = sor.u32 256, 8
        %815 = vbcast.lane.b32.xlu0 %v809, %s814
        %v816 = vpop.permute.xlu0 %815
        %v817 = vlaneseq
        %v818 = vshrl.u32 %v817, 7
        %v819 = vsub.s32 5, %v818
        %v820 = vrot.slane %v145, %v819
        %822 = vbcast.lane.b32.xlu0 %v820, 256
        %v823 = vpop.permute.xlu0 %822
        %s825 = sor.u32 256, 8
        %826 = vbcast.lane.b32.xlu0 %v820, %s825
        %v827 = vpop.permute.xlu0 %826
        %v828 = vlaneseq
        %v829 = vshrl.u32 %v828, 7
        %v830 = vsub.s32 6, %v829
        %v831 = vrot.slane %v145, %v830
        %833 = vbcast.lane.b32.xlu0 %v831, 256
        %v834 = vpop.permute.xlu0 %833
        %s836 = sor.u32 256, 8
        %837 = vbcast.lane.b32.xlu0 %v831, %s836
        %v838 = vpop.permute.xlu0 %837
        %v839 = vlaneseq
        %v840 = vshrl.u32 %v839, 7
        %v841 = vsub.s32 7, %v840
        %v842 = vrot.slane %v145, %v841
        %844 = vbcast.lane.b32.xlu0 %v842, 256
        %v845 = vpop.permute.xlu0 %844
        %s847 = sor.u32 256, 8
        %848 = vbcast.lane.b32.xlu0 %v842, %s847
        %v849 = vpop.permute.xlu0 %848
        %v850 = vcombine.low %v152, %v174
        %v851 = vcombine.high %v152, %v174
        %v853 = vunpack.c.l.s4 1983009808
        %v854 = vunpack.c.0.s8 %v853
        %v855 = vlaneseq
        %v856 = vshrl.u32 %v855, 7
        %v857 = vsub.s32 %v854, %v856
        %v858 = vrot.slane %v850, %v857
        %v860 = vunpack.c.l.s4 1983009808
        %v861 = vunpack.c.0.s8 %v860
        %v862 = vlaneseq
        %v863 = vshrl.u32 %v862, 7
        %v864 = vsub.s32 %v861, %v863
        %v865 = vrot.slane %v851, %v864
        %v866 = vcombine.low %v163, %v185
        %v867 = vcombine.high %v163, %v185
        %v869 = vunpack.c.l.s4 1983009808
        %v870 = vunpack.c.0.s8 %v869
        %v871 = vlaneseq
        %v872 = vshrl.u32 %v871, 7
        %v873 = vsub.s32 %v870, %v872
        %v874 = vrot.slane %v866, %v873
        %v876 = vunpack.c.l.s4 1983009808
        %v877 = vunpack.c.0.s8 %v876
        %v878 = vlaneseq
        %v879 = vshrl.u32 %v878, 7
        %v880 = vsub.s32 %v877, %v879
        %v881 = vrot.slane %v867, %v880
        %v882 = vcombine.low %v196, %v218
        %v883 = vcombine.high %v196, %v218
        %v885 = vunpack.c.l.s4 1983009808
        %v886 = vunpack.c.0.s8 %v885
        %v887 = vlaneseq
        %v888 = vshrl.u32 %v887, 7
        %v889 = vsub.s32 %v886, %v888
        %v890 = vrot.slane %v882, %v889
        %v892 = vunpack.c.l.s4 1983009808
        %v893 = vunpack.c.0.s8 %v892
        %v894 = vlaneseq
        %v895 = vshrl.u32 %v894, 7
        %v896 = vsub.s32 %v893, %v895
        %v897 = vrot.slane %v883, %v896
        %v898 = vcombine.low %v207, %v229
        %v899 = vcombine.high %v207, %v229
        %v901 = vunpack.c.l.s4 1983009808
        %v902 = vunpack.c.0.s8 %v901
        %v903 = vlaneseq
        %v904 = vshrl.u32 %v903, 7
        %v905 = vsub.s32 %v902, %v904
        %v906 = vrot.slane %v898, %v905
        %v908 = vunpack.c.l.s4 1983009808
        %v909 = vunpack.c.0.s8 %v908
        %v910 = vlaneseq
        %v911 = vshrl.u32 %v910, 7
        %v912 = vsub.s32 %v909, %v911
        %v913 = vrot.slane %v899, %v912
        %v914 = vcombine.low %v858, %v874
        %v915 = vcombine.high %v858, %v874
        %v917 = vunpack.c.l.s4 1934713408
        %v918 = vunpack.c.0.s8 %v917
        %v919 = vlaneseq
        %v920 = vshrl.u32 %v919, 7
        %v921 = vsub.s32 %v918, %v920
        %v922 = vrot.slane %v914, %v921
        %v924 = vunpack.c.l.s4 1934713408
        %v925 = vunpack.c.0.s8 %v924
        %v926 = vlaneseq
        %v927 = vshrl.u32 %v926, 7
        %v928 = vsub.s32 %v925, %v927
        %v929 = vrot.slane %v915, %v928
        %v930 = vcombine.low %v865, %v881
        %v931 = vcombine.high %v865, %v881
        %v933 = vunpack.c.l.s4 1934713408
        %v934 = vunpack.c.0.s8 %v933
        %v935 = vlaneseq
        %v936 = vshrl.u32 %v935, 7
        %v937 = vsub.s32 %v934, %v936
        %v938 = vrot.slane %v930, %v937
        %v940 = vunpack.c.l.s4 1934713408
        %v941 = vunpack.c.0.s8 %v940
        %v942 = vlaneseq
        %v943 = vshrl.u32 %v942, 7
        %v944 = vsub.s32 %v941, %v943
        %v945 = vrot.slane %v931, %v944
        %v946 = vcombine.low %v890, %v906
        %v947 = vcombine.high %v890, %v906
        %v949 = vunpack.c.l.s4 1934713408
        %v950 = vunpack.c.0.s8 %v949
        %v951 = vlaneseq
        %v952 = vshrl.u32 %v951, 7
        %v953 = vsub.s32 %v950, %v952
        %v954 = vrot.slane %v946, %v953
        %v956 = vunpack.c.l.s4 1934713408
        %v957 = vunpack.c.0.s8 %v956
        %v958 = vlaneseq
        %v959 = vshrl.u32 %v958, 7
        %v960 = vsub.s32 %v957, %v959
        %v961 = vrot.slane %v947, %v960
        %v962 = vcombine.low %v897, %v913
        %v963 = vcombine.high %v897, %v913
        %v965 = vunpack.c.l.s4 1934713408
        %v966 = vunpack.c.0.s8 %v965
        %v967 = vlaneseq
        %v968 = vshrl.u32 %v967, 7
        %v969 = vsub.s32 %v966, %v968
        %v970 = vrot.slane %v962, %v969
        %v972 = vunpack.c.l.s4 1934713408
        %v973 = vunpack.c.0.s8 %v972
        %v974 = vlaneseq
        %v975 = vshrl.u32 %v974, 7
        %v976 = vsub.s32 %v973, %v975
        %v977 = vrot.slane %v963, %v976
        %v978 = vcombine.low %v922, %v954
        %v979 = vcombine.high %v922, %v954
        %v980 = vcombine.low %v929, %v961
        %v981 = vcombine.high %v929, %v961
        %v982 = vcombine.low %v938, %v970
        %v983 = vcombine.high %v938, %v970
        %v984 = vcombine.low %v945, %v977
        %v985 = vcombine.high %v945, %v977
        %v986 = vcombine.low %v240, %v262
        %v987 = vcombine.high %v240, %v262
        %v989 = vunpack.c.l.s4 1983009808
        %v990 = vunpack.c.0.s8 %v989
        %v991 = vlaneseq
        %v992 = vshrl.u32 %v991, 7
        %v993 = vsub.s32 %v990, %v992
        %v994 = vrot.slane %v986, %v993
        %v996 = vunpack.c.l.s4 1983009808
        %v997 = vunpack.c.0.s8 %v996
        %v998 = vlaneseq
        %v999 = vshrl.u32 %v998, 7
        %v1000 = vsub.s32 %v997, %v999
        %v1001 = vrot.slane %v987, %v1000
        %v1002 = vcombine.low %v251, %v273
        %v1003 = vcombine.high %v251, %v273
        %v1005 = vunpack.c.l.s4 1983009808
        %v1006 = vunpack.c.0.s8 %v1005
        %v1007 = vlaneseq
        %v1008 = vshrl.u32 %v1007, 7
        %v1009 = vsub.s32 %v1006, %v1008
        %v1010 = vrot.slane %v1002, %v1009
        %v1012 = vunpack.c.l.s4 1983009808
        %v1013 = vunpack.c.0.s8 %v1012
        %v1014 = vlaneseq
        %v1015 = vshrl.u32 %v1014, 7
        %v1016 = vsub.s32 %v1013, %v1015
        %v1017 = vrot.slane %v1003, %v1016
        %v1018 = vcombine.low %v284, %v306
        %v1019 = vcombine.high %v284, %v306
        %v1021 = vunpack.c.l.s4 1983009808
        %v1022 = vunpack.c.0.s8 %v1021
        %v1023 = vlaneseq
        %v1024 = vshrl.u32 %v1023, 7
        %v1025 = vsub.s32 %v1022, %v1024
        %v1026 = vrot.slane %v1018, %v1025
        %v1028 = vunpack.c.l.s4 1983009808
        %v1029 = vunpack.c.0.s8 %v1028
        %v1030 = vlaneseq
        %v1031 = vshrl.u32 %v1030, 7
        %v1032 = vsub.s32 %v1029, %v1031
        %v1033 = vrot.slane %v1019, %v1032
        %v1034 = vcombine.low %v295, %v317
        %v1035 = vcombine.high %v295, %v317
        %v1037 = vunpack.c.l.s4 1983009808
        %v1038 = vunpack.c.0.s8 %v1037
        %v1039 = vlaneseq
        %v1040 = vshrl.u32 %v1039, 7
        %v1041 = vsub.s32 %v1038, %v1040
        %v1042 = vrot.slane %v1034, %v1041
        %v1044 = vunpack.c.l.s4 1983009808
        %v1045 = vunpack.c.0.s8 %v1044
        %v1046 = vlaneseq
        %v1047 = vshrl.u32 %v1046, 7
        %v1048 = vsub.s32 %v1045, %v1047
        %v1049 = vrot.slane %v1035, %v1048
        %v1050 = vcombine.low %v994, %v1010
        %v1051 = vcombine.high %v994, %v1010
        %v1053 = vunpack.c.l.s4 1934713408
        %v1054 = vunpack.c.0.s8 %v1053
        %v1055 = vlaneseq
        %v1056 = vshrl.u32 %v1055, 7
        %v1057 = vsub.s32 %v1054, %v1056
        %v1058 = vrot.slane %v1050, %v1057
        %v1060 = vunpack.c.l.s4 1934713408
        %v1061 = vunpack.c.0.s8 %v1060
        %v1062 = vlaneseq
        %v1063 = vshrl.u32 %v1062, 7
        %v1064 = vsub.s32 %v1061, %v1063
        %v1065 = vrot.slane %v1051, %v1064
        %v1066 = vcombine.low %v1001, %v1017
        %v1067 = vcombine.high %v1001, %v1017
        %v1069 = vunpack.c.l.s4 1934713408
        %v1070 = vunpack.c.0.s8 %v1069
        %v1071 = vlaneseq
        %v1072 = vshrl.u32 %v1071, 7
        %v1073 = vsub.s32 %v1070, %v1072
        %v1074 = vrot.slane %v1066, %v1073
        %v1076 = vunpack.c.l.s4 1934713408
        %v1077 = vunpack.c.0.s8 %v1076
        %v1078 = vlaneseq
        %v1079 = vshrl.u32 %v1078, 7
        %v1080 = vsub.s32 %v1077, %v1079
        %v1081 = vrot.slane %v1067, %v1080
        %v1082 = vcombine.low %v1026, %v1042
        %v1083 = vcombine.high %v1026, %v1042
        %v1085 = vunpack.c.l.s4 1934713408
        %v1086 = vunpack.c.0.s8 %v1085
        %v1087 = vlaneseq
        %v1088 = vshrl.u32 %v1087, 7
        %v1089 = vsub.s32 %v1086, %v1088
        %v1090 = vrot.slane %v1082, %v1089
        %v1092 = vunpack.c.l.s4 1934713408
        %v1093 = vunpack.c.0.s8 %v1092
        %v1094 = vlaneseq
        %v1095 = vshrl.u32 %v1094, 7
        %v1096 = vsub.s32 %v1093, %v1095
        %v1097 = vrot.slane %v1083, %v1096
        %v1098 = vcombine.low %v1033, %v1049
        %v1099 = vcombine.high %v1033, %v1049
        %v1101 = vunpack.c.l.s4 1934713408
        %v1102 = vunpack.c.0.s8 %v1101
        %v1103 = vlaneseq
        %v1104 = vshrl.u32 %v1103, 7
        %v1105 = vsub.s32 %v1102, %v1104
        %v1106 = vrot.slane %v1098, %v1105
        %v1108 = vunpack.c.l.s4 1934713408
        %v1109 = vunpack.c.0.s8 %v1108
        %v1110 = vlaneseq
        %v1111 = vshrl.u32 %v1110, 7
        %v1112 = vsub.s32 %v1109, %v1111
        %v1113 = vrot.slane %v1099, %v1112
        %v1114 = vcombine.low %v1058, %v1090
        %v1115 = vcombine.high %v1058, %v1090
        %v1116 = vcombine.low %v1065, %v1097
        %v1117 = vcombine.high %v1065, %v1097
        %v1118 = vcombine.low %v1074, %v1106
        %v1119 = vcombine.high %v1074, %v1106
        %v1120 = vcombine.low %v1081, %v1113
        %v1121 = vcombine.high %v1081, %v1113
        %v1122 = vcombine.low %v156, %v178
        %v1123 = vcombine.high %v156, %v178
        %v1125 = vunpack.c.l.s4 1983009808
        %v1126 = vunpack.c.0.s8 %v1125
        %v1127 = vlaneseq
        %v1128 = vshrl.u32 %v1127, 7
        %v1129 = vsub.s32 %v1126, %v1128
        %v1130 = vrot.slane %v1122, %v1129
        %v1132 = vunpack.c.l.s4 1983009808
        %v1133 = vunpack.c.0.s8 %v1132
        %v1134 = vlaneseq
        %v1135 = vshrl.u32 %v1134, 7
        %v1136 = vsub.s32 %v1133, %v1135
        %v1137 = vrot.slane %v1123, %v1136
        %v1138 = vcombine.low %v167, %v189
        %v1139 = vcombine.high %v167, %v189
        %v1141 = vunpack.c.l.s4 1983009808
        %v1142 = vunpack.c.0.s8 %v1141
        %v1143 = vlaneseq
        %v1144 = vshrl.u32 %v1143, 7
        %v1145 = vsub.s32 %v1142, %v1144
        %v1146 = vrot.slane %v1138, %v1145
        %v1148 = vunpack.c.l.s4 1983009808
        %v1149 = vunpack.c.0.s8 %v1148
        %v1150 = vlaneseq
        %v1151 = vshrl.u32 %v1150, 7
        %v1152 = vsub.s32 %v1149, %v1151
        %v1153 = vrot.slane %v1139, %v1152
        %v1154 = vcombine.low %v200, %v222
        %v1155 = vcombine.high %v200, %v222
        %v1157 = vunpack.c.l.s4 1983009808
        %v1158 = vunpack.c.0.s8 %v1157
        %v1159 = vlaneseq
        %v1160 = vshrl.u32 %v1159, 7
        %v1161 = vsub.s32 %v1158, %v1160
        %v1162 = vrot.slane %v1154, %v1161
        %v1164 = vunpack.c.l.s4 1983009808
        %v1165 = vunpack.c.0.s8 %v1164
        %v1166 = vlaneseq
        %v1167 = vshrl.u32 %v1166, 7
        %v1168 = vsub.s32 %v1165, %v1167
        %v1169 = vrot.slane %v1155, %v1168
        %v1170 = vcombine.low %v211, %v233
        %v1171 = vcombine.high %v211, %v233
        %v1173 = vunpack.c.l.s4 1983009808
        %v1174 = vunpack.c.0.s8 %v1173
        %v1175 = vlaneseq
        %v1176 = vshrl.u32 %v1175, 7
        %v1177 = vsub.s32 %v1174, %v1176
        %v1178 = vrot.slane %v1170, %v1177
        %v1180 = vunpack.c.l.s4 1983009808
        %v1181 = vunpack.c.0.s8 %v1180
        %v1182 = vlaneseq
        %v1183 = vshrl.u32 %v1182, 7
        %v1184 = vsub.s32 %v1181, %v1183
        %v1185 = vrot.slane %v1171, %v1184
        %v1186 = vcombine.low %v1130, %v1146
        %v1187 = vcombine.high %v1130, %v1146
        %v1189 = vunpack.c.l.s4 1934713408
        %v1190 = vunpack.c.0.s8 %v1189
        %v1191 = vlaneseq
        %v1192 = vshrl.u32 %v1191, 7
        %v1193 = vsub.s32 %v1190, %v1192
        %v1194 = vrot.slane %v1186, %v1193
        %v1196 = vunpack.c.l.s4 1934713408
        %v1197 = vunpack.c.0.s8 %v1196
        %v1198 = vlaneseq
        %v1199 = vshrl.u32 %v1198, 7
        %v1200 = vsub.s32 %v1197, %v1199
        %v1201 = vrot.slane %v1187, %v1200
        %v1202 = vcombine.low %v1137, %v1153
        %v1203 = vcombine.high %v1137, %v1153
        %v1205 = vunpack.c.l.s4 1934713408
        %v1206 = vunpack.c.0.s8 %v1205
        %v1207 = vlaneseq
        %v1208 = vshrl.u32 %v1207, 7
        %v1209 = vsub.s32 %v1206, %v1208
        %v1210 = vrot.slane %v1202, %v1209
        %v1212 = vunpack.c.l.s4 1934713408
        %v1213 = vunpack.c.0.s8 %v1212
        %v1214 = vlaneseq
        %v1215 = vshrl.u32 %v1214, 7
        %v1216 = vsub.s32 %v1213, %v1215
        %v1217 = vrot.slane %v1203, %v1216
        %v1218 = vcombine.low %v1162, %v1178
        %v1219 = vcombine.high %v1162, %v1178
        %v1221 = vunpack.c.l.s4 1934713408
        %v1222 = vunpack.c.0.s8 %v1221
        %v1223 = vlaneseq
        %v1224 = vshrl.u32 %v1223, 7
        %v1225 = vsub.s32 %v1222, %v1224
        %v1226 = vrot.slane %v1218, %v1225
        %v1228 = vunpack.c.l.s4 1934713408
        %v1229 = vunpack.c.0.s8 %v1228
        %v1230 = vlaneseq
        %v1231 = vshrl.u32 %v1230, 7
        %v1232 = vsub.s32 %v1229, %v1231
        %v1233 = vrot.slane %v1219, %v1232
        %v1234 = vcombine.low %v1169, %v1185
        %v1235 = vcombine.high %v1169, %v1185
        %v1237 = vunpack.c.l.s4 1934713408
        %v1238 = vunpack.c.0.s8 %v1237
        %v1239 = vlaneseq
        %v1240 = vshrl.u32 %v1239, 7
        %v1241 = vsub.s32 %v1238, %v1240
        %v1242 = vrot.slane %v1234, %v1241
        %v1244 = vunpack.c.l.s4 1934713408
        %v1245 = vunpack.c.0.s8 %v1244
        %v1246 = vlaneseq
        %v1247 = vshrl.u32 %v1246, 7
        %v1248 = vsub.s32 %v1245, %v1247
        %v1249 = vrot.slane %v1235, %v1248
        %v1250 = vcombine.low %v1194, %v1226
        %v1251 = vcombine.high %v1194, %v1226
        %v1252 = vcombine.low %v1201, %v1233
        %v1253 = vcombine.high %v1201, %v1233
        %v1254 = vcombine.low %v1210, %v1242
        %v1255 = vcombine.high %v1210, %v1242
        %v1256 = vcombine.low %v1217, %v1249
        %v1257 = vcombine.high %v1217, %v1249
        %v1258 = vcombine.low %v244, %v266
        %v1259 = vcombine.high %v244, %v266
        %v1261 = vunpack.c.l.s4 1983009808
        %v1262 = vunpack.c.0.s8 %v1261
        %v1263 = vlaneseq
        %v1264 = vshrl.u32 %v1263, 7
        %v1265 = vsub.s32 %v1262, %v1264
        %v1266 = vrot.slane %v1258, %v1265
        %v1268 = vunpack.c.l.s4 1983009808
        %v1269 = vunpack.c.0.s8 %v1268
        %v1270 = vlaneseq
        %v1271 = vshrl.u32 %v1270, 7
        %v1272 = vsub.s32 %v1269, %v1271
        %v1273 = vrot.slane %v1259, %v1272
        %v1274 = vcombine.low %v255, %v277
        %v1275 = vcombine.high %v255, %v277
        %v1277 = vunpack.c.l.s4 1983009808
        %v1278 = vunpack.c.0.s8 %v1277
        %v1279 = vlaneseq
        %v1280 = vshrl.u32 %v1279, 7
        %v1281 = vsub.s32 %v1278, %v1280
        %v1282 = vrot.slane %v1274, %v1281
        %v1284 = vunpack.c.l.s4 1983009808
        %v1285 = vunpack.c.0.s8 %v1284
        %v1286 = vlaneseq
        %v1287 = vshrl.u32 %v1286, 7
        %v1288 = vsub.s32 %v1285, %v1287
        %v1289 = vrot.slane %v1275, %v1288
        %v1290 = vcombine.low %v288, %v310
        %v1291 = vcombine.high %v288, %v310
        %v1293 = vunpack.c.l.s4 1983009808
        %v1294 = vunpack.c.0.s8 %v1293
        %v1295 = vlaneseq
        %v1296 = vshrl.u32 %v1295, 7
        %v1297 = vsub.s32 %v1294, %v1296
        %v1298 = vrot.slane %v1290, %v1297
        %v1300 = vunpack.c.l.s4 1983009808
        %v1301 = vunpack.c.0.s8 %v1300
        %v1302 = vlaneseq
        %v1303 = vshrl.u32 %v1302, 7
        %v1304 = vsub.s32 %v1301, %v1303
        %v1305 = vrot.slane %v1291, %v1304
        %v1306 = vcombine.low %v299, %v321
        %v1307 = vcombine.high %v299, %v321
        %v1309 = vunpack.c.l.s4 1983009808
        %v1310 = vunpack.c.0.s8 %v1309
        %v1311 = vlaneseq
        %v1312 = vshrl.u32 %v1311, 7
        %v1313 = vsub.s32 %v1310, %v1312
        %v1314 = vrot.slane %v1306, %v1313
        %v1316 = vunpack.c.l.s4 1983009808
        %v1317 = vunpack.c.0.s8 %v1316
        %v1318 = vlaneseq
        %v1319 = vshrl.u32 %v1318, 7
        %v1320 = vsub.s32 %v1317, %v1319
        %v1321 = vrot.slane %v1307, %v1320
        %v1322 = vcombine.low %v1266, %v1282
        %v1323 = vcombine.high %v1266, %v1282
        %v1325 = vunpack.c.l.s4 1934713408
        %v1326 = vunpack.c.0.s8 %v1325
        %v1327 = vlaneseq
        %v1328 = vshrl.u32 %v1327, 7
        %v1329 = vsub.s32 %v1326, %v1328
        %v1330 = vrot.slane %v1322, %v1329
        %v1332 = vunpack.c.l.s4 1934713408
        %v1333 = vunpack.c.0.s8 %v1332
        %v1334 = vlaneseq
        %v1335 = vshrl.u32 %v1334, 7
        %v1336 = vsub.s32 %v1333, %v1335
        %v1337 = vrot.slane %v1323, %v1336
        %v1338 = vcombine.low %v1273, %v1289
        %v1339 = vcombine.high %v1273, %v1289
        %v1341 = vunpack.c.l.s4 1934713408
        %v1342 = vunpack.c.0.s8 %v1341
        %v1343 = vlaneseq
        %v1344 = vshrl.u32 %v1343, 7
        %v1345 = vsub.s32 %v1342, %v1344
        %v1346 = vrot.slane %v1338, %v1345
        %v1348 = vunpack.c.l.s4 1934713408
        %v1349 = vunpack.c.0.s8 %v1348
        %v1350 = vlaneseq
        %v1351 = vshrl.u32 %v1350, 7
        %v1352 = vsub.s32 %v1349, %v1351
        %v1353 = vrot.slane %v1339, %v1352
        %v1354 = vcombine.low %v1298, %v1314
        %v1355 = vcombine.high %v1298, %v1314
        %v1357 = vunpack.c.l.s4 1934713408
        %v1358 = vunpack.c.0.s8 %v1357
        %v1359 = vlaneseq
        %v1360 = vshrl.u32 %v1359, 7
        %v1361 = vsub.s32 %v1358, %v1360
        %v1362 = vrot.slane %v1354, %v1361
        %v1364 = vunpack.c.l.s4 1934713408
        %v1365 = vunpack.c.0.s8 %v1364
        %v1366 = vlaneseq
        %v1367 = vshrl.u32 %v1366, 7
        %v1368 = vsub.s32 %v1365, %v1367
        %v1369 = vrot.slane %v1355, %v1368
        %v1370 = vcombine.low %v1305, %v1321
        %v1371 = vcombine.high %v1305, %v1321
        %v1373 = vunpack.c.l.s4 1934713408
        %v1374 = vunpack.c.0.s8 %v1373
        %v1375 = vlaneseq
        %v1376 = vshrl.u32 %v1375, 7
        %v1377 = vsub.s32 %v1374, %v1376
        %v1378 = vrot.slane %v1370, %v1377
        %v1380 = vunpack.c.l.s4 1934713408
        %v1381 = vunpack.c.0.s8 %v1380
        %v1382 = vlaneseq
        %v1383 = vshrl.u32 %v1382, 7
        %v1384 = vsub.s32 %v1381, %v1383
        %v1385 = vrot.slane %v1371, %v1384
        %v1386 = vcombine.low %v1330, %v1362
        %v1387 = vcombine.high %v1330, %v1362
        %v1388 = vcombine.low %v1337, %v1369
        %v1389 = vcombine.high %v1337, %v1369
        %v1390 = vcombine.low %v1346, %v1378
        %v1391 = vcombine.high %v1346, %v1378
        %v1392 = vcombine.low %v1353, %v1385
        %v1393 = vcombine.high %v1353, %v1385
        %v1394 = vcombine.low %v328, %v350
        %v1395 = vcombine.high %v328, %v350
        %v1397 = vunpack.c.l.s4 1983009808
        %v1398 = vunpack.c.0.s8 %v1397
        %v1399 = vlaneseq
        %v1400 = vshrl.u32 %v1399, 7
        %v1401 = vsub.s32 %v1398, %v1400
        %v1402 = vrot.slane %v1394, %v1401
        %v1404 = vunpack.c.l.s4 1983009808
        %v1405 = vunpack.c.0.s8 %v1404
        %v1406 = vlaneseq
        %v1407 = vshrl.u32 %v1406, 7
        %v1408 = vsub.s32 %v1405, %v1407
        %v1409 = vrot.slane %v1395, %v1408
        %v1410 = vcombine.low %v339, %v361
        %v1411 = vcombine.high %v339, %v361
        %v1413 = vunpack.c.l.s4 1983009808
        %v1414 = vunpack.c.0.s8 %v1413
        %v1415 = vlaneseq
        %v1416 = vshrl.u32 %v1415, 7
        %v1417 = vsub.s32 %v1414, %v1416
        %v1418 = vrot.slane %v1410, %v1417
        %v1420 = vunpack.c.l.s4 1983009808
        %v1421 = vunpack.c.0.s8 %v1420
        %v1422 = vlaneseq
        %v1423 = vshrl.u32 %v1422, 7
        %v1424 = vsub.s32 %v1421, %v1423
        %v1425 = vrot.slane %v1411, %v1424
        %v1426 = vcombine.low %v372, %v394
        %v1427 = vcombine.high %v372, %v394
        %v1429 = vunpack.c.l.s4 1983009808
        %v1430 = vunpack.c.0.s8 %v1429
        %v1431 = vlaneseq
        %v1432 = vshrl.u32 %v1431, 7
        %v1433 = vsub.s32 %v1430, %v1432
        %v1434 = vrot.slane %v1426, %v1433
        %v1436 = vunpack.c.l.s4 1983009808
        %v1437 = vunpack.c.0.s8 %v1436
        %v1438 = vlaneseq
        %v1439 = vshrl.u32 %v1438, 7
        %v1440 = vsub.s32 %v1437, %v1439
        %v1441 = vrot.slane %v1427, %v1440
        %v1442 = vcombine.low %v383, %v405
        %v1443 = vcombine.high %v383, %v405
        %v1445 = vunpack.c.l.s4 1983009808
        %v1446 = vunpack.c.0.s8 %v1445
        %v1447 = vlaneseq
        %v1448 = vshrl.u32 %v1447, 7
        %v1449 = vsub.s32 %v1446, %v1448
        %v1450 = vrot.slane %v1442, %v1449
        %v1452 = vunpack.c.l.s4 1983009808
        %v1453 = vunpack.c.0.s8 %v1452
        %v1454 = vlaneseq
        %v1455 = vshrl.u32 %v1454, 7
        %v1456 = vsub.s32 %v1453, %v1455
        %v1457 = vrot.slane %v1443, %v1456
        %v1458 = vcombine.low %v1402, %v1418
        %v1459 = vcombine.high %v1402, %v1418
        %v1461 = vunpack.c.l.s4 1934713408
        %v1462 = vunpack.c.0.s8 %v1461
        %v1463 = vlaneseq
        %v1464 = vshrl.u32 %v1463, 7
        %v1465 = vsub.s32 %v1462, %v1464
        %v1466 = vrot.slane %v1458, %v1465
        %v1468 = vunpack.c.l.s4 1934713408
        %v1469 = vunpack.c.0.s8 %v1468
        %v1470 = vlaneseq
        %v1471 = vshrl.u32 %v1470, 7
        %v1472 = vsub.s32 %v1469, %v1471
        %v1473 = vrot.slane %v1459, %v1472
        %v1474 = vcombine.low %v1409, %v1425
        %v1475 = vcombine.high %v1409, %v1425
        %v1477 = vunpack.c.l.s4 1934713408
        %v1478 = vunpack.c.0.s8 %v1477
        %v1479 = vlaneseq
        %v1480 = vshrl.u32 %v1479, 7
        %v1481 = vsub.s32 %v1478, %v1480
        %v1482 = vrot.slane %v1474, %v1481
        %v1484 = vunpack.c.l.s4 1934713408
        %v1485 = vunpack.c.0.s8 %v1484
        %v1486 = vlaneseq
        %v1487 = vshrl.u32 %v1486, 7
        %v1488 = vsub.s32 %v1485, %v1487
        %v1489 = vrot.slane %v1475, %v1488
        %v1490 = vcombine.low %v1434, %v1450
        %v1491 = vcombine.high %v1434, %v1450
        %v1493 = vunpack.c.l.s4 1934713408
        %v1494 = vunpack.c.0.s8 %v1493
        %v1495 = vlaneseq
        %v1496 = vshrl.u32 %v1495, 7
        %v1497 = vsub.s32 %v1494, %v1496
        %v1498 = vrot.slane %v1490, %v1497
        %v1500 = vunpack.c.l.s4 1934713408
        %v1501 = vunpack.c.0.s8 %v1500
        %v1502 = vlaneseq
        %v1503 = vshrl.u32 %v1502, 7
        %v1504 = vsub.s32 %v1501, %v1503
        %v1505 = vrot.slane %v1491, %v1504
        %v1506 = vcombine.low %v1441, %v1457
        %v1507 = vcombine.high %v1441, %v1457
        %v1509 = vunpack.c.l.s4 1934713408
        %v1510 = vunpack.c.0.s8 %v1509
        %v1511 = vlaneseq
        %v1512 = vshrl.u32 %v1511, 7
        %v1513 = vsub.s32 %v1510, %v1512
        %v1514 = vrot.slane %v1506, %v1513
        %v1516 = vunpack.c.l.s4 1934713408
        %v1517 = vunpack.c.0.s8 %v1516
        %v1518 = vlaneseq
        %v1519 = vshrl.u32 %v1518, 7
        %v1520 = vsub.s32 %v1517, %v1519
        %v1521 = vrot.slane %v1507, %v1520
        %v1522 = vcombine.low %v1466, %v1498
        %v1523 = vcombine.high %v1466, %v1498
        %v1524 = vcombine.low %v1473, %v1505
        %v1525 = vcombine.high %v1473, %v1505
        %v1526 = vcombine.low %v1482, %v1514
        %v1527 = vcombine.high %v1482, %v1514
        %v1528 = vcombine.low %v1489, %v1521
        %v1529 = vcombine.high %v1489, %v1521
        %v1530 = vcombine.low %v416, %v438
        %v1531 = vcombine.high %v416, %v438
        %v1533 = vunpack.c.l.s4 1983009808
        %v1534 = vunpack.c.0.s8 %v1533
        %v1535 = vlaneseq
        %v1536 = vshrl.u32 %v1535, 7
        %v1537 = vsub.s32 %v1534, %v1536
        %v1538 = vrot.slane %v1530, %v1537
        %v1540 = vunpack.c.l.s4 1983009808
        %v1541 = vunpack.c.0.s8 %v1540
        %v1542 = vlaneseq
        %v1543 = vshrl.u32 %v1542, 7
        %v1544 = vsub.s32 %v1541, %v1543
        %v1545 = vrot.slane %v1531, %v1544
        %v1546 = vcombine.low %v427, %v449
        %v1547 = vcombine.high %v427, %v449
        %v1549 = vunpack.c.l.s4 1983009808
        %v1550 = vunpack.c.0.s8 %v1549
        %v1551 = vlaneseq
        %v1552 = vshrl.u32 %v1551, 7
        %v1553 = vsub.s32 %v1550, %v1552
        %v1554 = vrot.slane %v1546, %v1553
        %v1556 = vunpack.c.l.s4 1983009808
        %v1557 = vunpack.c.0.s8 %v1556
        %v1558 = vlaneseq
        %v1559 = vshrl.u32 %v1558, 7
        %v1560 = vsub.s32 %v1557, %v1559
        %v1561 = vrot.slane %v1547, %v1560
        %v1562 = vcombine.low %v460, %v482
        %v1563 = vcombine.high %v460, %v482
        %v1565 = vunpack.c.l.s4 1983009808
        %v1566 = vunpack.c.0.s8 %v1565
        %v1567 = vlaneseq
        %v1568 = vshrl.u32 %v1567, 7
        %v1569 = vsub.s32 %v1566, %v1568
        %v1570 = vrot.slane %v1562, %v1569
        %v1572 = vunpack.c.l.s4 1983009808
        %v1573 = vunpack.c.0.s8 %v1572
        %v1574 = vlaneseq
        %v1575 = vshrl.u32 %v1574, 7
        %v1576 = vsub.s32 %v1573, %v1575
        %v1577 = vrot.slane %v1563, %v1576
        %v1578 = vcombine.low %v471, %v493
        %v1579 = vcombine.high %v471, %v493
        %v1581 = vunpack.c.l.s4 1983009808
        %v1582 = vunpack.c.0.s8 %v1581
        %v1583 = vlaneseq
        %v1584 = vshrl.u32 %v1583, 7
        %v1585 = vsub.s32 %v1582, %v1584
        %v1586 = vrot.slane %v1578, %v1585
        %v1588 = vunpack.c.l.s4 1983009808
        %v1589 = vunpack.c.0.s8 %v1588
        %v1590 = vlaneseq
        %v1591 = vshrl.u32 %v1590, 7
        %v1592 = vsub.s32 %v1589, %v1591
        %v1593 = vrot.slane %v1579, %v1592
        %v1594 = vcombine.low %v1538, %v1554
        %v1595 = vcombine.high %v1538, %v1554
        %v1597 = vunpack.c.l.s4 1934713408
        %v1598 = vunpack.c.0.s8 %v1597
        %v1599 = vlaneseq
        %v1600 = vshrl.u32 %v1599, 7
        %v1601 = vsub.s32 %v1598, %v1600
        %v1602 = vrot.slane %v1594, %v1601
        %v1604 = vunpack.c.l.s4 1934713408
        %v1605 = vunpack.c.0.s8 %v1604
        %v1606 = vlaneseq
        %v1607 = vshrl.u32 %v1606, 7
        %v1608 = vsub.s32 %v1605, %v1607
        %v1609 = vrot.slane %v1595, %v1608
        %v1610 = vcombine.low %v1545, %v1561
        %v1611 = vcombine.high %v1545, %v1561
        %v1613 = vunpack.c.l.s4 1934713408
        %v1614 = vunpack.c.0.s8 %v1613
        %v1615 = vlaneseq
        %v1616 = vshrl.u32 %v1615, 7
        %v1617 = vsub.s32 %v1614, %v1616
        %v1618 = vrot.slane %v1610, %v1617
        %v1620 = vunpack.c.l.s4 1934713408
        %v1621 = vunpack.c.0.s8 %v1620
        %v1622 = vlaneseq
        %v1623 = vshrl.u32 %v1622, 7
        %v1624 = vsub.s32 %v1621, %v1623
        %v1625 = vrot.slane %v1611, %v1624
        %v1626 = vcombine.low %v1570, %v1586
        %v1627 = vcombine.high %v1570, %v1586
        %v1629 = vunpack.c.l.s4 1934713408
        %v1630 = vunpack.c.0.s8 %v1629
        %v1631 = vlaneseq
        %v1632 = vshrl.u32 %v1631, 7
        %v1633 = vsub.s32 %v1630, %v1632
        %v1634 = vrot.slane %v1626, %v1633
        %v1636 = vunpack.c.l.s4 1934713408
        %v1637 = vunpack.c.0.s8 %v1636
        %v1638 = vlaneseq
        %v1639 = vshrl.u32 %v1638, 7
        %v1640 = vsub.s32 %v1637, %v1639
        %v1641 = vrot.slane %v1627, %v1640
        %v1642 = vcombine.low %v1577, %v1593
        %v1643 = vcombine.high %v1577, %v1593
        %v1645 = vunpack.c.l.s4 1934713408
        %v1646 = vunpack.c.0.s8 %v1645
        %v1647 = vlaneseq
        %v1648 = vshrl.u32 %v1647, 7
        %v1649 = vsub.s32 %v1646, %v1648
        %v1650 = vrot.slane %v1642, %v1649
        %v1652 = vunpack.c.l.s4 1934713408
        %v1653 = vunpack.c.0.s8 %v1652
        %v1654 = vlaneseq
        %v1655 = vshrl.u32 %v1654, 7
        %v1656 = vsub.s32 %v1653, %v1655
        %v1657 = vrot.slane %v1643, %v1656
        %v1658 = vcombine.low %v1602, %v1634
        %v1659 = vcombine.high %v1602, %v1634
        %v1660 = vcombine.low %v1609, %v1641
        %v1661 = vcombine.high %v1609, %v1641
        %v1662 = vcombine.low %v1618, %v1650
        %v1663 = vcombine.high %v1618, %v1650
        %v1664 = vcombine.low %v1625, %v1657
        %v1665 = vcombine.high %v1625, %v1657
        %v1666 = vcombine.low %v332, %v354
        %v1667 = vcombine.high %v332, %v354
        %v1669 = vunpack.c.l.s4 1983009808
        %v1670 = vunpack.c.0.s8 %v1669
        %v1671 = vlaneseq
        %v1672 = vshrl.u32 %v1671, 7
        %v1673 = vsub.s32 %v1670, %v1672
        %v1674 = vrot.slane %v1666, %v1673
        %v1676 = vunpack.c.l.s4 1983009808
        %v1677 = vunpack.c.0.s8 %v1676
        %v1678 = vlaneseq
        %v1679 = vshrl.u32 %v1678, 7
        %v1680 = vsub.s32 %v1677, %v1679
        %v1681 = vrot.slane %v1667, %v1680
        %v1682 = vcombine.low %v343, %v365
        %v1683 = vcombine.high %v343, %v365
        %v1685 = vunpack.c.l.s4 1983009808
        %v1686 = vunpack.c.0.s8 %v1685
        %v1687 = vlaneseq
        %v1688 = vshrl.u32 %v1687, 7
        %v1689 = vsub.s32 %v1686, %v1688
        %v1690 = vrot.slane %v1682, %v1689
        %v1692 = vunpack.c.l.s4 1983009808
        %v1693 = vunpack.c.0.s8 %v1692
        %v1694 = vlaneseq
        %v1695 = vshrl.u32 %v1694, 7
        %v1696 = vsub.s32 %v1693, %v1695
        %v1697 = vrot.slane %v1683, %v1696
        %v1698 = vcombine.low %v376, %v398
        %v1699 = vcombine.high %v376, %v398
        %v1701 = vunpack.c.l.s4 1983009808
        %v1702 = vunpack.c.0.s8 %v1701
        %v1703 = vlaneseq
        %v1704 = vshrl.u32 %v1703, 7
        %v1705 = vsub.s32 %v1702, %v1704
        %v1706 = vrot.slane %v1698, %v1705
        %v1708 = vunpack.c.l.s4 1983009808
        %v1709 = vunpack.c.0.s8 %v1708
        %v1710 = vlaneseq
        %v1711 = vshrl.u32 %v1710, 7
        %v1712 = vsub.s32 %v1709, %v1711
        %v1713 = vrot.slane %v1699, %v1712
        %v1714 = vcombine.low %v387, %v409
        %v1715 = vcombine.high %v387, %v409
        %v1717 = vunpack.c.l.s4 1983009808
        %v1718 = vunpack.c.0.s8 %v1717
        %v1719 = vlaneseq
        %v1720 = vshrl.u32 %v1719, 7
        %v1721 = vsub.s32 %v1718, %v1720
        %v1722 = vrot.slane %v1714, %v1721
        %v1724 = vunpack.c.l.s4 1983009808
        %v1725 = vunpack.c.0.s8 %v1724
        %v1726 = vlaneseq
        %v1727 = vshrl.u32 %v1726, 7
        %v1728 = vsub.s32 %v1725, %v1727
        %v1729 = vrot.slane %v1715, %v1728
        %v1730 = vcombine.low %v1674, %v1690
        %v1731 = vcombine.high %v1674, %v1690
        %v1733 = vunpack.c.l.s4 1934713408
        %v1734 = vunpack.c.0.s8 %v1733
        %v1735 = vlaneseq
        %v1736 = vshrl.u32 %v1735, 7
        %v1737 = vsub.s32 %v1734, %v1736
        %v1738 = vrot.slane %v1730, %v1737
        %v1740 = vunpack.c.l.s4 1934713408
        %v1741 = vunpack.c.0.s8 %v1740
        %v1742 = vlaneseq
        %v1743 = vshrl.u32 %v1742, 7
        %v1744 = vsub.s32 %v1741, %v1743
        %v1745 = vrot.slane %v1731, %v1744
        %v1746 = vcombine.low %v1681, %v1697
        %v1747 = vcombine.high %v1681, %v1697
        %v1749 = vunpack.c.l.s4 1934713408
        %v1750 = vunpack.c.0.s8 %v1749
        %v1751 = vlaneseq
        %v1752 = vshrl.u32 %v1751, 7
        %v1753 = vsub.s32 %v1750, %v1752
        %v1754 = vrot.slane %v1746, %v1753
        %v1756 = vunpack.c.l.s4 1934713408
        %v1757 = vunpack.c.0.s8 %v1756
        %v1758 = vlaneseq
        %v1759 = vshrl.u32 %v1758, 7
        %v1760 = vsub.s32 %v1757, %v1759
        %v1761 = vrot.slane %v1747, %v1760
        %v1762 = vcombine.low %v1706, %v1722
        %v1763 = vcombine.high %v1706, %v1722
        %v1765 = vunpack.c.l.s4 1934713408
        %v1766 = vunpack.c.0.s8 %v1765
        %v1767 = vlaneseq
        %v1768 = vshrl.u32 %v1767, 7
        %v1769 = vsub.s32 %v1766, %v1768
        %v1770 = vrot.slane %v1762, %v1769
        %v1772 = vunpack.c.l.s4 1934713408
        %v1773 = vunpack.c.0.s8 %v1772
        %v1774 = vlaneseq
        %v1775 = vshrl.u32 %v1774, 7
        %v1776 = vsub.s32 %v1773, %v1775
        %v1777 = vrot.slane %v1763, %v1776
        %v1778 = vcombine.low %v1713, %v1729
        %v1779 = vcombine.high %v1713, %v1729
        %v1781 = vunpack.c.l.s4 1934713408
        %v1782 = vunpack.c.0.s8 %v1781
        %v1783 = vlaneseq
        %v1784 = vshrl.u32 %v1783, 7
        %v1785 = vsub.s32 %v1782, %v1784
        %v1786 = vrot.slane %v1778, %v1785
        %v1788 = vunpack.c.l.s4 1934713408
        %v1789 = vunpack.c.0.s8 %v1788
        %v1790 = vlaneseq
        %v1791 = vshrl.u32 %v1790, 7
        %v1792 = vsub.s32 %v1789, %v1791
        %v1793 = vrot.slane %v1779, %v1792
        %v1794 = vcombine.low %v1738, %v1770
        %v1795 = vcombine.high %v1738, %v1770
        %v1796 = vcombine.low %v1745, %v1777
        %v1797 = vcombine.high %v1745, %v1777
        %v1798 = vcombine.low %v1754, %v1786
        %v1799 = vcombine.high %v1754, %v1786
        %v1800 = vcombine.low %v1761, %v1793
        %v1801 = vcombine.high %v1761, %v1793
        %v1802 = vcombine.low %v420, %v442
        %v1803 = vcombine.high %v420, %v442
        %v1805 = vunpack.c.l.s4 1983009808
        %v1806 = vunpack.c.0.s8 %v1805
        %v1807 = vlaneseq
        %v1808 = vshrl.u32 %v1807, 7
        %v1809 = vsub.s32 %v1806, %v1808
        %v1810 = vrot.slane %v1802, %v1809
        %v1812 = vunpack.c.l.s4 1983009808
        %v1813 = vunpack.c.0.s8 %v1812
        %v1814 = vlaneseq
        %v1815 = vshrl.u32 %v1814, 7
        %v1816 = vsub.s32 %v1813, %v1815
        %v1817 = vrot.slane %v1803, %v1816
        %v1818 = vcombine.low %v431, %v453
        %v1819 = vcombine.high %v431, %v453
        %v1821 = vunpack.c.l.s4 1983009808
        %v1822 = vunpack.c.0.s8 %v1821
        %v1823 = vlaneseq
        %v1824 = vshrl.u32 %v1823, 7
        %v1825 = vsub.s32 %v1822, %v1824
        %v1826 = vrot.slane %v1818, %v1825
        %v1828 = vunpack.c.l.s4 1983009808
        %v1829 = vunpack.c.0.s8 %v1828
        %v1830 = vlaneseq
        %v1831 = vshrl.u32 %v1830, 7
        %v1832 = vsub.s32 %v1829, %v1831
        %v1833 = vrot.slane %v1819, %v1832
        %v1834 = vcombine.low %v464, %v486
        %v1835 = vcombine.high %v464, %v486
        %v1837 = vunpack.c.l.s4 1983009808
        %v1838 = vunpack.c.0.s8 %v1837
        %v1839 = vlaneseq
        %v1840 = vshrl.u32 %v1839, 7
        %v1841 = vsub.s32 %v1838, %v1840
        %v1842 = vrot.slane %v1834, %v1841
        %v1844 = vunpack.c.l.s4 1983009808
        %v1845 = vunpack.c.0.s8 %v1844
        %v1846 = vlaneseq
        %v1847 = vshrl.u32 %v1846, 7
        %v1848 = vsub.s32 %v1845, %v1847
        %v1849 = vrot.slane %v1835, %v1848
        %v1850 = vcombine.low %v475, %v497
        %v1851 = vcombine.high %v475, %v497
        %v1853 = vunpack.c.l.s4 1983009808
        %v1854 = vunpack.c.0.s8 %v1853
        %v1855 = vlaneseq
        %v1856 = vshrl.u32 %v1855, 7
        %v1857 = vsub.s32 %v1854, %v1856
        %v1858 = vrot.slane %v1850, %v1857
        %v1860 = vunpack.c.l.s4 1983009808
        %v1861 = vunpack.c.0.s8 %v1860
        %v1862 = vlaneseq
        %v1863 = vshrl.u32 %v1862, 7
        %v1864 = vsub.s32 %v1861, %v1863
        %v1865 = vrot.slane %v1851, %v1864
        %v1866 = vcombine.low %v1810, %v1826
        %v1867 = vcombine.high %v1810, %v1826
        %v1869 = vunpack.c.l.s4 1934713408
        %v1870 = vunpack.c.0.s8 %v1869
        %v1871 = vlaneseq
        %v1872 = vshrl.u32 %v1871, 7
        %v1873 = vsub.s32 %v1870, %v1872
        %v1874 = vrot.slane %v1866, %v1873
        %v1876 = vunpack.c.l.s4 1934713408
        %v1877 = vunpack.c.0.s8 %v1876
        %v1878 = vlaneseq
        %v1879 = vshrl.u32 %v1878, 7
        %v1880 = vsub.s32 %v1877, %v1879
        %v1881 = vrot.slane %v1867, %v1880
        %v1882 = vcombine.low %v1817, %v1833
        %v1883 = vcombine.high %v1817, %v1833
        %v1885 = vunpack.c.l.s4 1934713408
        %v1886 = vunpack.c.0.s8 %v1885
        %v1887 = vlaneseq
        %v1888 = vshrl.u32 %v1887, 7
        %v1889 = vsub.s32 %v1886, %v1888
        %v1890 = vrot.slane %v1882, %v1889
        %v1892 = vunpack.c.l.s4 1934713408
        %v1893 = vunpack.c.0.s8 %v1892
        %v1894 = vlaneseq
        %v1895 = vshrl.u32 %v1894, 7
        %v1896 = vsub.s32 %v1893, %v1895
        %v1897 = vrot.slane %v1883, %v1896
        %v1898 = vcombine.low %v1842, %v1858
        %v1899 = vcombine.high %v1842, %v1858
        %v1901 = vunpack.c.l.s4 1934713408
        %v1902 = vunpack.c.0.s8 %v1901
        %v1903 = vlaneseq
        %v1904 = vshrl.u32 %v1903, 7
        %v1905 = vsub.s32 %v1902, %v1904
        %v1906 = vrot.slane %v1898, %v1905
        %v1908 = vunpack.c.l.s4 1934713408
        %v1909 = vunpack.c.0.s8 %v1908
        %v1910 = vlaneseq
        %v1911 = vshrl.u32 %v1910, 7
        %v1912 = vsub.s32 %v1909, %v1911
        %v1913 = vrot.slane %v1899, %v1912
        %v1914 = vcombine.low %v1849, %v1865
        %v1915 = vcombine.high %v1849, %v1865
        %v1917 = vunpack.c.l.s4 1934713408
        %v1918 = vunpack.c.0.s8 %v1917
        %v1919 = vlaneseq
        %v1920 = vshrl.u32 %v1919, 7
        %v1921 = vsub.s32 %v1918, %v1920
        %v1922 = vrot.slane %v1914, %v1921
        %v1924 = vunpack.c.l.s4 1934713408
        %v1925 = vunpack.c.0.s8 %v1924
        %v1926 = vlaneseq
        %v1927 = vshrl.u32 %v1926, 7
        %v1928 = vsub.s32 %v1925, %v1927
        %v1929 = vrot.slane %v1915, %v1928
        %v1930 = vcombine.low %v1874, %v1906
        %v1931 = vcombine.high %v1874, %v1906
        %v1932 = vcombine.low %v1881, %v1913
        %v1933 = vcombine.high %v1881, %v1913
        %v1934 = vcombine.low %v1890, %v1922
        %v1935 = vcombine.high %v1890, %v1922
        %v1936 = vcombine.low %v1897, %v1929
        %v1937 = vcombine.high %v1897, %v1929
        %v1938 = vcombine.low %v504, %v526
        %v1939 = vcombine.high %v504, %v526
        %v1941 = vunpack.c.l.s4 1983009808
        %v1942 = vunpack.c.0.s8 %v1941
        %v1943 = vlaneseq
        %v1944 = vshrl.u32 %v1943, 7
        %v1945 = vsub.s32 %v1942, %v1944
        %v1946 = vrot.slane %v1938, %v1945
        %v1948 = vunpack.c.l.s4 1983009808
        %v1949 = vunpack.c.0.s8 %v1948
        %v1950 = vlaneseq
        %v1951 = vshrl.u32 %v1950, 7
        %v1952 = vsub.s32 %v1949, %v1951
        %v1953 = vrot.slane %v1939, %v1952
        %v1954 = vcombine.low %v515, %v537
        %v1955 = vcombine.high %v515, %v537
        %v1957 = vunpack.c.l.s4 1983009808
        %v1958 = vunpack.c.0.s8 %v1957
        %v1959 = vlaneseq
        %v1960 = vshrl.u32 %v1959, 7
        %v1961 = vsub.s32 %v1958, %v1960
        %v1962 = vrot.slane %v1954, %v1961
        %v1964 = vunpack.c.l.s4 1983009808
        %v1965 = vunpack.c.0.s8 %v1964
        %v1966 = vlaneseq
        %v1967 = vshrl.u32 %v1966, 7
        %v1968 = vsub.s32 %v1965, %v1967
        %v1969 = vrot.slane %v1955, %v1968
        %v1970 = vcombine.low %v548, %v570
        %v1971 = vcombine.high %v548, %v570
        %v1973 = vunpack.c.l.s4 1983009808
        %v1974 = vunpack.c.0.s8 %v1973
        %v1975 = vlaneseq
        %v1976 = vshrl.u32 %v1975, 7
        %v1977 = vsub.s32 %v1974, %v1976
        %v1978 = vrot.slane %v1970, %v1977
        %v1980 = vunpack.c.l.s4 1983009808
        %v1981 = vunpack.c.0.s8 %v1980
        %v1982 = vlaneseq
        %v1983 = vshrl.u32 %v1982, 7
        %v1984 = vsub.s32 %v1981, %v1983
        %v1985 = vrot.slane %v1971, %v1984
        %v1986 = vcombine.low %v559, %v581
        %v1987 = vcombine.high %v559, %v581
        %v1989 = vunpack.c.l.s4 1983009808
        %v1990 = vunpack.c.0.s8 %v1989
        %v1991 = vlaneseq
        %v1992 = vshrl.u32 %v1991, 7
        %v1993 = vsub.s32 %v1990, %v1992
        %v1994 = vrot.slane %v1986, %v1993
        %v1996 = vunpack.c.l.s4 1983009808
        %v1997 = vunpack.c.0.s8 %v1996
        %v1998 = vlaneseq
        %v1999 = vshrl.u32 %v1998, 7
        %v2000 = vsub.s32 %v1997, %v1999
        %v2001 = vrot.slane %v1987, %v2000
        %v2002 = vcombine.low %v1946, %v1962
        %v2003 = vcombine.high %v1946, %v1962
        %v2005 = vunpack.c.l.s4 1934713408
        %v2006 = vunpack.c.0.s8 %v2005
        %v2007 = vlaneseq
        %v2008 = vshrl.u32 %v2007, 7
        %v2009 = vsub.s32 %v2006, %v2008
        %v2010 = vrot.slane %v2002, %v2009
        %v2012 = vunpack.c.l.s4 1934713408
        %v2013 = vunpack.c.0.s8 %v2012
        %v2014 = vlaneseq
        %v2015 = vshrl.u32 %v2014, 7
        %v2016 = vsub.s32 %v2013, %v2015
        %v2017 = vrot.slane %v2003, %v2016
        %v2018 = vcombine.low %v1953, %v1969
        %v2019 = vcombine.high %v1953, %v1969
        %v2021 = vunpack.c.l.s4 1934713408
        %v2022 = vunpack.c.0.s8 %v2021
        %v2023 = vlaneseq
        %v2024 = vshrl.u32 %v2023, 7
        %v2025 = vsub.s32 %v2022, %v2024
        %v2026 = vrot.slane %v2018, %v2025
        %v2028 = vunpack.c.l.s4 1934713408
        %v2029 = vunpack.c.0.s8 %v2028
        %v2030 = vlaneseq
        %v2031 = vshrl.u32 %v2030, 7
        %v2032 = vsub.s32 %v2029, %v2031
        %v2033 = vrot.slane %v2019, %v2032
        %v2034 = vcombine.low %v1978, %v1994
        %v2035 = vcombine.high %v1978, %v1994
        %v2037 = vunpack.c.l.s4 1934713408
        %v2038 = vunpack.c.0.s8 %v2037
        %v2039 = vlaneseq
        %v2040 = vshrl.u32 %v2039, 7
        %v2041 = vsub.s32 %v2038, %v2040
        %v2042 = vrot.slane %v2034, %v2041
        %v2044 = vunpack.c.l.s4 1934713408
        %v2045 = vunpack.c.0.s8 %v2044
        %v2046 = vlaneseq
        %v2047 = vshrl.u32 %v2046, 7
        %v2048 = vsub.s32 %v2045, %v2047
        %v2049 = vrot.slane %v2035, %v2048
        %v2050 = vcombine.low %v1985, %v2001
        %v2051 = vcombine.high %v1985, %v2001
        %v2053 = vunpack.c.l.s4 1934713408
        %v2054 = vunpack.c.0.s8 %v2053
        %v2055 = vlaneseq
        %v2056 = vshrl.u32 %v2055, 7
        %v2057 = vsub.s32 %v2054, %v2056
        %v2058 = vrot.slane %v2050, %v2057
        %v2060 = vunpack.c.l.s4 1934713408
        %v2061 = vunpack.c.0.s8 %v2060
        %v2062 = vlaneseq
        %v2063 = vshrl.u32 %v2062, 7
        %v2064 = vsub.s32 %v2061, %v2063
        %v2065 = vrot.slane %v2051, %v2064
        %v2066 = vcombine.low %v2010, %v2042
        %v2067 = vcombine.high %v2010, %v2042
        %v2068 = vcombine.low %v2017, %v2049
        %v2069 = vcombine.high %v2017, %v2049
        %v2070 = vcombine.low %v2026, %v2058
        %v2071 = vcombine.high %v2026, %v2058
        %v2072 = vcombine.low %v2033, %v2065
        %v2073 = vcombine.high %v2033, %v2065
        %v2074 = vcombine.low %v592, %v614
        %v2075 = vcombine.high %v592, %v614
        %v2077 = vunpack.c.l.s4 1983009808
        %v2078 = vunpack.c.0.s8 %v2077
        %v2079 = vlaneseq
        %v2080 = vshrl.u32 %v2079, 7
        %v2081 = vsub.s32 %v2078, %v2080
        %v2082 = vrot.slane %v2074, %v2081
        %v2084 = vunpack.c.l.s4 1983009808
        %v2085 = vunpack.c.0.s8 %v2084
        %v2086 = vlaneseq
        %v2087 = vshrl.u32 %v2086, 7
        %v2088 = vsub.s32 %v2085, %v2087
        %v2089 = vrot.slane %v2075, %v2088
        %v2090 = vcombine.low %v603, %v625
        %v2091 = vcombine.high %v603, %v625
        %v2093 = vunpack.c.l.s4 1983009808
        %v2094 = vunpack.c.0.s8 %v2093
        %v2095 = vlaneseq
        %v2096 = vshrl.u32 %v2095, 7
        %v2097 = vsub.s32 %v2094, %v2096
        %v2098 = vrot.slane %v2090, %v2097
        %v2100 = vunpack.c.l.s4 1983009808
        %v2101 = vunpack.c.0.s8 %v2100
        %v2102 = vlaneseq
        %v2103 = vshrl.u32 %v2102, 7
        %v2104 = vsub.s32 %v2101, %v2103
        %v2105 = vrot.slane %v2091, %v2104
        %v2106 = vcombine.low %v636, %v658
        %v2107 = vcombine.high %v636, %v658
        %v2109 = vunpack.c.l.s4 1983009808
        %v2110 = vunpack.c.0.s8 %v2109
        %v2111 = vlaneseq
        %v2112 = vshrl.u32 %v2111, 7
        %v2113 = vsub.s32 %v2110, %v2112
        %v2114 = vrot.slane %v2106, %v2113
        %v2116 = vunpack.c.l.s4 1983009808
        %v2117 = vunpack.c.0.s8 %v2116
        %v2118 = vlaneseq
        %v2119 = vshrl.u32 %v2118, 7
        %v2120 = vsub.s32 %v2117, %v2119
        %v2121 = vrot.slane %v2107, %v2120
        %v2122 = vcombine.low %v647, %v669
        %v2123 = vcombine.high %v647, %v669
        %v2125 = vunpack.c.l.s4 1983009808
        %v2126 = vunpack.c.0.s8 %v2125
        %v2127 = vlaneseq
        %v2128 = vshrl.u32 %v2127, 7
        %v2129 = vsub.s32 %v2126, %v2128
        %v2130 = vrot.slane %v2122, %v2129
        %v2132 = vunpack.c.l.s4 1983009808
        %v2133 = vunpack.c.0.s8 %v2132
        %v2134 = vlaneseq
        %v2135 = vshrl.u32 %v2134, 7
        %v2136 = vsub.s32 %v2133, %v2135
        %v2137 = vrot.slane %v2123, %v2136
        %v2138 = vcombine.low %v2082, %v2098
        %v2139 = vcombine.high %v2082, %v2098
        %v2141 = vunpack.c.l.s4 1934713408
        %v2142 = vunpack.c.0.s8 %v2141
        %v2143 = vlaneseq
        %v2144 = vshrl.u32 %v2143, 7
        %v2145 = vsub.s32 %v2142, %v2144
        %v2146 = vrot.slane %v2138, %v2145
        %v2148 = vunpack.c.l.s4 1934713408
        %v2149 = vunpack.c.0.s8 %v2148
        %v2150 = vlaneseq
        %v2151 = vshrl.u32 %v2150, 7
        %v2152 = vsub.s32 %v2149, %v2151
        %v2153 = vrot.slane %v2139, %v2152
        %v2154 = vcombine.low %v2089, %v2105
        %v2155 = vcombine.high %v2089, %v2105
        %v2157 = vunpack.c.l.s4 1934713408
        %v2158 = vunpack.c.0.s8 %v2157
        %v2159 = vlaneseq
        %v2160 = vshrl.u32 %v2159, 7
        %v2161 = vsub.s32 %v2158, %v2160
        %v2162 = vrot.slane %v2154, %v2161
        %v2164 = vunpack.c.l.s4 1934713408
        %v2165 = vunpack.c.0.s8 %v2164
        %v2166 = vlaneseq
        %v2167 = vshrl.u32 %v2166, 7
        %v2168 = vsub.s32 %v2165, %v2167
        %v2169 = vrot.slane %v2155, %v2168
        %v2170 = vcombine.low %v2114, %v2130
        %v2171 = vcombine.high %v2114, %v2130
        %v2173 = vunpack.c.l.s4 1934713408
        %v2174 = vunpack.c.0.s8 %v2173
        %v2175 = vlaneseq
        %v2176 = vshrl.u32 %v2175, 7
        %v2177 = vsub.s32 %v2174, %v2176
        %v2178 = vrot.slane %v2170, %v2177
        %v2180 = vunpack.c.l.s4 1934713408
        %v2181 = vunpack.c.0.s8 %v2180
        %v2182 = vlaneseq
        %v2183 = vshrl.u32 %v2182, 7
        %v2184 = vsub.s32 %v2181, %v2183
        %v2185 = vrot.slane %v2171, %v2184
        %v2186 = vcombine.low %v2121, %v2137
        %v2187 = vcombine.high %v2121, %v2137
        %v2189 = vunpack.c.l.s4 1934713408
        %v2190 = vunpack.c.0.s8 %v2189
        %v2191 = vlaneseq
        %v2192 = vshrl.u32 %v2191, 7
        %v2193 = vsub.s32 %v2190, %v2192
        %v2194 = vrot.slane %v2186, %v2193
        %v2196 = vunpack.c.l.s4 1934713408
        %v2197 = vunpack.c.0.s8 %v2196
        %v2198 = vlaneseq
        %v2199 = vshrl.u32 %v2198, 7
        %v2200 = vsub.s32 %v2197, %v2199
        %v2201 = vrot.slane %v2187, %v2200
        %v2202 = vcombine.low %v2146, %v2178
        %v2203 = vcombine.high %v2146, %v2178
        %v2204 = vcombine.low %v2153, %v2185
        %v2205 = vcombine.high %v2153, %v2185
        %v2206 = vcombine.low %v2162, %v2194
        %v2207 = vcombine.high %v2162, %v2194
        %v2208 = vcombine.low %v2169, %v2201
        %v2209 = vcombine.high %v2169, %v2201
        %v2210 = vcombine.low %v508, %v530
        %v2211 = vcombine.high %v508, %v530
        %v2213 = vunpack.c.l.s4 1983009808
        %v2214 = vunpack.c.0.s8 %v2213
        %v2215 = vlaneseq
        %v2216 = vshrl.u32 %v2215, 7
        %v2217 = vsub.s32 %v2214, %v2216
        %v2218 = vrot.slane %v2210, %v2217
        %v2220 = vunpack.c.l.s4 1983009808
        %v2221 = vunpack.c.0.s8 %v2220
        %v2222 = vlaneseq
        %v2223 = vshrl.u32 %v2222, 7
        %v2224 = vsub.s32 %v2221, %v2223
        %v2225 = vrot.slane %v2211, %v2224
        %v2226 = vcombine.low %v519, %v541
        %v2227 = vcombine.high %v519, %v541
        %v2229 = vunpack.c.l.s4 1983009808
        %v2230 = vunpack.c.0.s8 %v2229
        %v2231 = vlaneseq
        %v2232 = vshrl.u32 %v2231, 7
        %v2233 = vsub.s32 %v2230, %v2232
        %v2234 = vrot.slane %v2226, %v2233
        %v2236 = vunpack.c.l.s4 1983009808
        %v2237 = vunpack.c.0.s8 %v2236
        %v2238 = vlaneseq
        %v2239 = vshrl.u32 %v2238, 7
        %v2240 = vsub.s32 %v2237, %v2239
        %v2241 = vrot.slane %v2227, %v2240
        %v2242 = vcombine.low %v552, %v574
        %v2243 = vcombine.high %v552, %v574
        %v2245 = vunpack.c.l.s4 1983009808
        %v2246 = vunpack.c.0.s8 %v2245
        %v2247 = vlaneseq
        %v2248 = vshrl.u32 %v2247, 7
        %v2249 = vsub.s32 %v2246, %v2248
        %v2250 = vrot.slane %v2242, %v2249
        %v2252 = vunpack.c.l.s4 1983009808
        %v2253 = vunpack.c.0.s8 %v2252
        %v2254 = vlaneseq
        %v2255 = vshrl.u32 %v2254, 7
        %v2256 = vsub.s32 %v2253, %v2255
        %v2257 = vrot.slane %v2243, %v2256
        %v2258 = vcombine.low %v563, %v585
        %v2259 = vcombine.high %v563, %v585
        %v2261 = vunpack.c.l.s4 1983009808
        %v2262 = vunpack.c.0.s8 %v2261
        %v2263 = vlaneseq
        %v2264 = vshrl.u32 %v2263, 7
        %v2265 = vsub.s32 %v2262, %v2264
        %v2266 = vrot.slane %v2258, %v2265
        %v2268 = vunpack.c.l.s4 1983009808
        %v2269 = vunpack.c.0.s8 %v2268
        %v2270 = vlaneseq
        %v2271 = vshrl.u32 %v2270, 7
        %v2272 = vsub.s32 %v2269, %v2271
        %v2273 = vrot.slane %v2259, %v2272
        %v2274 = vcombine.low %v2218, %v2234
        %v2275 = vcombine.high %v2218, %v2234
        %v2277 = vunpack.c.l.s4 1934713408
        %v2278 = vunpack.c.0.s8 %v2277
        %v2279 = vlaneseq
        %v2280 = vshrl.u32 %v2279, 7
        %v2281 = vsub.s32 %v2278, %v2280
        %v2282 = vrot.slane %v2274, %v2281
        %v2284 = vunpack.c.l.s4 1934713408
        %v2285 = vunpack.c.0.s8 %v2284
        %v2286 = vlaneseq
        %v2287 = vshrl.u32 %v2286, 7
        %v2288 = vsub.s32 %v2285, %v2287
        %v2289 = vrot.slane %v2275, %v2288
        %v2290 = vcombine.low %v2225, %v2241
        %v2291 = vcombine.high %v2225, %v2241
        %v2293 = vunpack.c.l.s4 1934713408
        %v2294 = vunpack.c.0.s8 %v2293
        %v2295 = vlaneseq
        %v2296 = vshrl.u32 %v2295, 7
        %v2297 = vsub.s32 %v2294, %v2296
        %v2298 = vrot.slane %v2290, %v2297
        %v2300 = vunpack.c.l.s4 1934713408
        %v2301 = vunpack.c.0.s8 %v2300
        %v2302 = vlaneseq
        %v2303 = vshrl.u32 %v2302, 7
        %v2304 = vsub.s32 %v2301, %v2303
        %v2305 = vrot.slane %v2291, %v2304
        %v2306 = vcombine.low %v2250, %v2266
        %v2307 = vcombine.high %v2250, %v2266
        %v2309 = vunpack.c.l.s4 1934713408
        %v2310 = vunpack.c.0.s8 %v2309
        %v2311 = vlaneseq
        %v2312 = vshrl.u32 %v2311, 7
        %v2313 = vsub.s32 %v2310, %v2312
        %v2314 = vrot.slane %v2306, %v2313
        %v2316 = vunpack.c.l.s4 1934713408
        %v2317 = vunpack.c.0.s8 %v2316
        %v2318 = vlaneseq
        %v2319 = vshrl.u32 %v2318, 7
        %v2320 = vsub.s32 %v2317, %v2319
        %v2321 = vrot.slane %v2307, %v2320
        %v2322 = vcombine.low %v2257, %v2273
        %v2323 = vcombine.high %v2257, %v2273
        %v2325 = vunpack.c.l.s4 1934713408
        %v2326 = vunpack.c.0.s8 %v2325
        %v2327 = vlaneseq
        %v2328 = vshrl.u32 %v2327, 7
        %v2329 = vsub.s32 %v2326, %v2328
        %v2330 = vrot.slane %v2322, %v2329
        %v2332 = vunpack.c.l.s4 1934713408
        %v2333 = vunpack.c.0.s8 %v2332
        %v2334 = vlaneseq
        %v2335 = vshrl.u32 %v2334, 7
        %v2336 = vsub.s32 %v2333, %v2335
        %v2337 = vrot.slane %v2323, %v2336
        %v2338 = vcombine.low %v2282, %v2314
        %v2339 = vcombine.high %v2282, %v2314
        %v2340 = vcombine.low %v2289, %v2321
        %v2341 = vcombine.high %v2289, %v2321
        %v2342 = vcombine.low %v2298, %v2330
        %v2343 = vcombine.high %v2298, %v2330
        %v2344 = vcombine.low %v2305, %v2337
        %v2345 = vcombine.high %v2305, %v2337
        %v2346 = vcombine.low %v596, %v618
        %v2347 = vcombine.high %v596, %v618
        %v2349 = vunpack.c.l.s4 1983009808
        %v2350 = vunpack.c.0.s8 %v2349
        %v2351 = vlaneseq
        %v2352 = vshrl.u32 %v2351, 7
        %v2353 = vsub.s32 %v2350, %v2352
        %v2354 = vrot.slane %v2346, %v2353
        %v2356 = vunpack.c.l.s4 1983009808
        %v2357 = vunpack.c.0.s8 %v2356
        %v2358 = vlaneseq
        %v2359 = vshrl.u32 %v2358, 7
        %v2360 = vsub.s32 %v2357, %v2359
        %v2361 = vrot.slane %v2347, %v2360
        %v2362 = vcombine.low %v607, %v629
        %v2363 = vcombine.high %v607, %v629
        %v2365 = vunpack.c.l.s4 1983009808
        %v2366 = vunpack.c.0.s8 %v2365
        %v2367 = vlaneseq
        %v2368 = vshrl.u32 %v2367, 7
        %v2369 = vsub.s32 %v2366, %v2368
        %v2370 = vrot.slane %v2362, %v2369
        %v2372 = vunpack.c.l.s4 1983009808
        %v2373 = vunpack.c.0.s8 %v2372
        %v2374 = vlaneseq
        %v2375 = vshrl.u32 %v2374, 7
        %v2376 = vsub.s32 %v2373, %v2375
        %v2377 = vrot.slane %v2363, %v2376
        %v2378 = vcombine.low %v640, %v662
        %v2379 = vcombine.high %v640, %v662
        %v2381 = vunpack.c.l.s4 1983009808
        %v2382 = vunpack.c.0.s8 %v2381
        %v2383 = vlaneseq
        %v2384 = vshrl.u32 %v2383, 7
        %v2385 = vsub.s32 %v2382, %v2384
        %v2386 = vrot.slane %v2378, %v2385
        %v2388 = vunpack.c.l.s4 1983009808
        %v2389 = vunpack.c.0.s8 %v2388
        %v2390 = vlaneseq
        %v2391 = vshrl.u32 %v2390, 7
        %v2392 = vsub.s32 %v2389, %v2391
        %v2393 = vrot.slane %v2379, %v2392
        %v2394 = vcombine.low %v651, %v673
        %v2395 = vcombine.high %v651, %v673
        %v2397 = vunpack.c.l.s4 1983009808
        %v2398 = vunpack.c.0.s8 %v2397
        %v2399 = vlaneseq
        %v2400 = vshrl.u32 %v2399, 7
        %v2401 = vsub.s32 %v2398, %v2400
        %v2402 = vrot.slane %v2394, %v2401
        %v2404 = vunpack.c.l.s4 1983009808
        %v2405 = vunpack.c.0.s8 %v2404
        %v2406 = vlaneseq
        %v2407 = vshrl.u32 %v2406, 7
        %v2408 = vsub.s32 %v2405, %v2407
        %v2409 = vrot.slane %v2395, %v2408
        %v2410 = vcombine.low %v2354, %v2370
        %v2411 = vcombine.high %v2354, %v2370
        %v2413 = vunpack.c.l.s4 1934713408
        %v2414 = vunpack.c.0.s8 %v2413
        %v2415 = vlaneseq
        %v2416 = vshrl.u32 %v2415, 7
        %v2417 = vsub.s32 %v2414, %v2416
        %v2418 = vrot.slane %v2410, %v2417
        %v2420 = vunpack.c.l.s4 1934713408
        %v2421 = vunpack.c.0.s8 %v2420
        %v2422 = vlaneseq
        %v2423 = vshrl.u32 %v2422, 7
        %v2424 = vsub.s32 %v2421, %v2423
        %v2425 = vrot.slane %v2411, %v2424
        %v2426 = vcombine.low %v2361, %v2377
        %v2427 = vcombine.high %v2361, %v2377
        %v2429 = vunpack.c.l.s4 1934713408
        %v2430 = vunpack.c.0.s8 %v2429
        %v2431 = vlaneseq
        %v2432 = vshrl.u32 %v2431, 7
        %v2433 = vsub.s32 %v2430, %v2432
        %v2434 = vrot.slane %v2426, %v2433
        %v2436 = vunpack.c.l.s4 1934713408
        %v2437 = vunpack.c.0.s8 %v2436
        %v2438 = vlaneseq
        %v2439 = vshrl.u32 %v2438, 7
        %v2440 = vsub.s32 %v2437, %v2439
        %v2441 = vrot.slane %v2427, %v2440
        %v2442 = vcombine.low %v2386, %v2402
        %v2443 = vcombine.high %v2386, %v2402
        %v2445 = vunpack.c.l.s4 1934713408
        %v2446 = vunpack.c.0.s8 %v2445
        %v2447 = vlaneseq
        %v2448 = vshrl.u32 %v2447, 7
        %v2449 = vsub.s32 %v2446, %v2448
        %v2450 = vrot.slane %v2442, %v2449
        %v2452 = vunpack.c.l.s4 1934713408
        %v2453 = vunpack.c.0.s8 %v2452
        %v2454 = vlaneseq
        %v2455 = vshrl.u32 %v2454, 7
        %v2456 = vsub.s32 %v2453, %v2455
        %v2457 = vrot.slane %v2443, %v2456
        %v2458 = vcombine.low %v2393, %v2409
        %v2459 = vcombine.high %v2393, %v2409
        %v2461 = vunpack.c.l.s4 1934713408
        %v2462 = vunpack.c.0.s8 %v2461
        %v2463 = vlaneseq
        %v2464 = vshrl.u32 %v2463, 7
        %v2465 = vsub.s32 %v2462, %v2464
        %v2466 = vrot.slane %v2458, %v2465
        %v2468 = vunpack.c.l.s4 1934713408
        %v2469 = vunpack.c.0.s8 %v2468
        %v2470 = vlaneseq
        %v2471 = vshrl.u32 %v2470, 7
        %v2472 = vsub.s32 %v2469, %v2471
        %v2473 = vrot.slane %v2459, %v2472
        %v2474 = vcombine.low %v2418, %v2450
        %v2475 = vcombine.high %v2418, %v2450
        %v2476 = vcombine.low %v2425, %v2457
        %v2477 = vcombine.high %v2425, %v2457
        %v2478 = vcombine.low %v2434, %v2466
        %v2479 = vcombine.high %v2434, %v2466
        %v2480 = vcombine.low %v2441, %v2473
        %v2481 = vcombine.high %v2441, %v2473
        %v2482 = vcombine.low %v680, %v702
        %v2483 = vcombine.high %v680, %v702
        %v2485 = vunpack.c.l.s4 1983009808
        %v2486 = vunpack.c.0.s8 %v2485
        %v2487 = vlaneseq
        %v2488 = vshrl.u32 %v2487, 7
        %v2489 = vsub.s32 %v2486, %v2488
        %v2490 = vrot.slane %v2482, %v2489
        %v2492 = vunpack.c.l.s4 1983009808
        %v2493 = vunpack.c.0.s8 %v2492
        %v2494 = vlaneseq
        %v2495 = vshrl.u32 %v2494, 7
        %v2496 = vsub.s32 %v2493, %v2495
        %v2497 = vrot.slane %v2483, %v2496
        %v2498 = vcombine.low %v691, %v713
        %v2499 = vcombine.high %v691, %v713
        %v2501 = vunpack.c.l.s4 1983009808
        %v2502 = vunpack.c.0.s8 %v2501
        %v2503 = vlaneseq
        %v2504 = vshrl.u32 %v2503, 7
        %v2505 = vsub.s32 %v2502, %v2504
        %v2506 = vrot.slane %v2498, %v2505
        %v2508 = vunpack.c.l.s4 1983009808
        %v2509 = vunpack.c.0.s8 %v2508
        %v2510 = vlaneseq
        %v2511 = vshrl.u32 %v2510, 7
        %v2512 = vsub.s32 %v2509, %v2511
        %v2513 = vrot.slane %v2499, %v2512
        %v2514 = vcombine.low %v724, %v746
        %v2515 = vcombine.high %v724, %v746
        %v2517 = vunpack.c.l.s4 1983009808
        %v2518 = vunpack.c.0.s8 %v2517
        %v2519 = vlaneseq
        %v2520 = vshrl.u32 %v2519, 7
        %v2521 = vsub.s32 %v2518, %v2520
        %v2522 = vrot.slane %v2514, %v2521
        %v2524 = vunpack.c.l.s4 1983009808
        %v2525 = vunpack.c.0.s8 %v2524
        %v2526 = vlaneseq
        %v2527 = vshrl.u32 %v2526, 7
        %v2528 = vsub.s32 %v2525, %v2527
        %v2529 = vrot.slane %v2515, %v2528
        %v2530 = vcombine.low %v735, %v757
        %v2531 = vcombine.high %v735, %v757
        %v2533 = vunpack.c.l.s4 1983009808
        %v2534 = vunpack.c.0.s8 %v2533
        %v2535 = vlaneseq
        %v2536 = vshrl.u32 %v2535, 7
        %v2537 = vsub.s32 %v2534, %v2536
        %v2538 = vrot.slane %v2530, %v2537
        %v2540 = vunpack.c.l.s4 1983009808
        %v2541 = vunpack.c.0.s8 %v2540
        %v2542 = vlaneseq
        %v2543 = vshrl.u32 %v2542, 7
        %v2544 = vsub.s32 %v2541, %v2543
        %v2545 = vrot.slane %v2531, %v2544
        %v2546 = vcombine.low %v2490, %v2506
        %v2547 = vcombine.high %v2490, %v2506
        %v2549 = vunpack.c.l.s4 1934713408
        %v2550 = vunpack.c.0.s8 %v2549
        %v2551 = vlaneseq
        %v2552 = vshrl.u32 %v2551, 7
        %v2553 = vsub.s32 %v2550, %v2552
        %v2554 = vrot.slane %v2546, %v2553
        %v2556 = vunpack.c.l.s4 1934713408
        %v2557 = vunpack.c.0.s8 %v2556
        %v2558 = vlaneseq
        %v2559 = vshrl.u32 %v2558, 7
        %v2560 = vsub.s32 %v2557, %v2559
        %v2561 = vrot.slane %v2547, %v2560
        %v2562 = vcombine.low %v2497, %v2513
        %v2563 = vcombine.high %v2497, %v2513
        %v2565 = vunpack.c.l.s4 1934713408
        %v2566 = vunpack.c.0.s8 %v2565
        %v2567 = vlaneseq
        %v2568 = vshrl.u32 %v2567, 7
        %v2569 = vsub.s32 %v2566, %v2568
        %v2570 = vrot.slane %v2562, %v2569
        %v2572 = vunpack.c.l.s4 1934713408
        %v2573 = vunpack.c.0.s8 %v2572
        %v2574 = vlaneseq
        %v2575 = vshrl.u32 %v2574, 7
        %v2576 = vsub.s32 %v2573, %v2575
        %v2577 = vrot.slane %v2563, %v2576
        %v2578 = vcombine.low %v2522, %v2538
        %v2579 = vcombine.high %v2522, %v2538
        %v2581 = vunpack.c.l.s4 1934713408
        %v2582 = vunpack.c.0.s8 %v2581
        %v2583 = vlaneseq
        %v2584 = vshrl.u32 %v2583, 7
        %v2585 = vsub.s32 %v2582, %v2584
        %v2586 = vrot.slane %v2578, %v2585
        %v2588 = vunpack.c.l.s4 1934713408
        %v2589 = vunpack.c.0.s8 %v2588
        %v2590 = vlaneseq
        %v2591 = vshrl.u32 %v2590, 7
        %v2592 = vsub.s32 %v2589, %v2591
        %v2593 = vrot.slane %v2579, %v2592
        %v2594 = vcombine.low %v2529, %v2545
        %v2595 = vcombine.high %v2529, %v2545
        %v2597 = vunpack.c.l.s4 1934713408
        %v2598 = vunpack.c.0.s8 %v2597
        %v2599 = vlaneseq
        %v2600 = vshrl.u32 %v2599, 7
        %v2601 = vsub.s32 %v2598, %v2600
        %v2602 = vrot.slane %v2594, %v2601
        %v2604 = vunpack.c.l.s4 1934713408
        %v2605 = vunpack.c.0.s8 %v2604
        %v2606 = vlaneseq
        %v2607 = vshrl.u32 %v2606, 7
        %v2608 = vsub.s32 %v2605, %v2607
        %v2609 = vrot.slane %v2595, %v2608
        %v2610 = vcombine.low %v2554, %v2586
        %v2611 = vcombine.high %v2554, %v2586
        %v2612 = vcombine.low %v2561, %v2593
        %v2613 = vcombine.high %v2561, %v2593
        %v2614 = vcombine.low %v2570, %v2602
        %v2615 = vcombine.high %v2570, %v2602
        %v2616 = vcombine.low %v2577, %v2609
        %v2617 = vcombine.high %v2577, %v2609
        %v2618 = vcombine.low %v768, %v790
        %v2619 = vcombine.high %v768, %v790
        %v2621 = vunpack.c.l.s4 1983009808
        %v2622 = vunpack.c.0.s8 %v2621
        %v2623 = vlaneseq
        %v2624 = vshrl.u32 %v2623, 7
        %v2625 = vsub.s32 %v2622, %v2624
        %v2626 = vrot.slane %v2618, %v2625
        %v2628 = vunpack.c.l.s4 1983009808
        %v2629 = vunpack.c.0.s8 %v2628
        %v2630 = vlaneseq
        %v2631 = vshrl.u32 %v2630, 7
        %v2632 = vsub.s32 %v2629, %v2631
        %v2633 = vrot.slane %v2619, %v2632
        %v2634 = vcombine.low %v779, %v801
        %v2635 = vcombine.high %v779, %v801
        %v2637 = vunpack.c.l.s4 1983009808
        %v2638 = vunpack.c.0.s8 %v2637
        %v2639 = vlaneseq
        %v2640 = vshrl.u32 %v2639, 7
        %v2641 = vsub.s32 %v2638, %v2640
        %v2642 = vrot.slane %v2634, %v2641
        %v2644 = vunpack.c.l.s4 1983009808
        %v2645 = vunpack.c.0.s8 %v2644
        %v2646 = vlaneseq
        %v2647 = vshrl.u32 %v2646, 7
        %v2648 = vsub.s32 %v2645, %v2647
        %v2649 = vrot.slane %v2635, %v2648
        %v2650 = vcombine.low %v812, %v834
        %v2651 = vcombine.high %v812, %v834
        %v2653 = vunpack.c.l.s4 1983009808
        %v2654 = vunpack.c.0.s8 %v2653
        %v2655 = vlaneseq
        %v2656 = vshrl.u32 %v2655, 7
        %v2657 = vsub.s32 %v2654, %v2656
        %v2658 = vrot.slane %v2650, %v2657
        %v2660 = vunpack.c.l.s4 1983009808
        %v2661 = vunpack.c.0.s8 %v2660
        %v2662 = vlaneseq
        %v2663 = vshrl.u32 %v2662, 7
        %v2664 = vsub.s32 %v2661, %v2663
        %v2665 = vrot.slane %v2651, %v2664
        %v2666 = vcombine.low %v823, %v845
        %v2667 = vcombine.high %v823, %v845
        %v2669 = vunpack.c.l.s4 1983009808
        %v2670 = vunpack.c.0.s8 %v2669
        %v2671 = vlaneseq
        %v2672 = vshrl.u32 %v2671, 7
        %v2673 = vsub.s32 %v2670, %v2672
        %v2674 = vrot.slane %v2666, %v2673
        %v2676 = vunpack.c.l.s4 1983009808
        %v2677 = vunpack.c.0.s8 %v2676
        %v2678 = vlaneseq
        %v2679 = vshrl.u32 %v2678, 7
        %v2680 = vsub.s32 %v2677, %v2679
        %v2681 = vrot.slane %v2667, %v2680
        %v2682 = vcombine.low %v2626, %v2642
        %v2683 = vcombine.high %v2626, %v2642
        %v2685 = vunpack.c.l.s4 1934713408
        %v2686 = vunpack.c.0.s8 %v2685
        %v2687 = vlaneseq
        %v2688 = vshrl.u32 %v2687, 7
        %v2689 = vsub.s32 %v2686, %v2688
        %v2690 = vrot.slane %v2682, %v2689
        %v2692 = vunpack.c.l.s4 1934713408
        %v2693 = vunpack.c.0.s8 %v2692
        %v2694 = vlaneseq
        %v2695 = vshrl.u32 %v2694, 7
        %v2696 = vsub.s32 %v2693, %v2695
        %v2697 = vrot.slane %v2683, %v2696
        %v2698 = vcombine.low %v2633, %v2649
        %v2699 = vcombine.high %v2633, %v2649
        %v2701 = vunpack.c.l.s4 1934713408
        %v2702 = vunpack.c.0.s8 %v2701
        %v2703 = vlaneseq
        %v2704 = vshrl.u32 %v2703, 7
        %v2705 = vsub.s32 %v2702, %v2704
        %v2706 = vrot.slane %v2698, %v2705
        %v2708 = vunpack.c.l.s4 1934713408
        %v2709 = vunpack.c.0.s8 %v2708
        %v2710 = vlaneseq
        %v2711 = vshrl.u32 %v2710, 7
        %v2712 = vsub.s32 %v2709, %v2711
        %v2713 = vrot.slane %v2699, %v2712
        %v2714 = vcombine.low %v2658, %v2674
        %v2715 = vcombine.high %v2658, %v2674
        %v2717 = vunpack.c.l.s4 1934713408
        %v2718 = vunpack.c.0.s8 %v2717
        %v2719 = vlaneseq
        %v2720 = vshrl.u32 %v2719, 7
        %v2721 = vsub.s32 %v2718, %v2720
        %v2722 = vrot.slane %v2714, %v2721
        %v2724 = vunpack.c.l.s4 1934713408
        %v2725 = vunpack.c.0.s8 %v2724
        %v2726 = vlaneseq
        %v2727 = vshrl.u32 %v2726, 7
        %v2728 = vsub.s32 %v2725, %v2727
        %v2729 = vrot.slane %v2715, %v2728
        %v2730 = vcombine.low %v2665, %v2681
        %v2731 = vcombine.high %v2665, %v2681
        %v2733 = vunpack.c.l.s4 1934713408
        %v2734 = vunpack.c.0.s8 %v2733
        %v2735 = vlaneseq
        %v2736 = vshrl.u32 %v2735, 7
        %v2737 = vsub.s32 %v2734, %v2736
        %v2738 = vrot.slane %v2730, %v2737
        %v2740 = vunpack.c.l.s4 1934713408
        %v2741 = vunpack.c.0.s8 %v2740
        %v2742 = vlaneseq
        %v2743 = vshrl.u32 %v2742, 7
        %v2744 = vsub.s32 %v2741, %v2743
        %v2745 = vrot.slane %v2731, %v2744
        %v2746 = vcombine.low %v2690, %v2722
        %v2747 = vcombine.high %v2690, %v2722
        %v2748 = vcombine.low %v2697, %v2729
        %v2749 = vcombine.high %v2697, %v2729
        %v2750 = vcombine.low %v2706, %v2738
        %v2751 = vcombine.high %v2706, %v2738
        %v2752 = vcombine.low %v2713, %v2745
        %v2753 = vcombine.high %v2713, %v2745
        %v2754 = vcombine.low %v684, %v706
        %v2755 = vcombine.high %v684, %v706
        %v2757 = vunpack.c.l.s4 1983009808
        %v2758 = vunpack.c.0.s8 %v2757
        %v2759 = vlaneseq
        %v2760 = vshrl.u32 %v2759, 7
        %v2761 = vsub.s32 %v2758, %v2760
        %v2762 = vrot.slane %v2754, %v2761
        %v2764 = vunpack.c.l.s4 1983009808
        %v2765 = vunpack.c.0.s8 %v2764
        %v2766 = vlaneseq
        %v2767 = vshrl.u32 %v2766, 7
        %v2768 = vsub.s32 %v2765, %v2767
        %v2769 = vrot.slane %v2755, %v2768
        %v2770 = vcombine.low %v695, %v717
        %v2771 = vcombine.high %v695, %v717
        %v2773 = vunpack.c.l.s4 1983009808
        %v2774 = vunpack.c.0.s8 %v2773
        %v2775 = vlaneseq
        %v2776 = vshrl.u32 %v2775, 7
        %v2777 = vsub.s32 %v2774, %v2776
        %v2778 = vrot.slane %v2770, %v2777
        %v2780 = vunpack.c.l.s4 1983009808
        %v2781 = vunpack.c.0.s8 %v2780
        %v2782 = vlaneseq
        %v2783 = vshrl.u32 %v2782, 7
        %v2784 = vsub.s32 %v2781, %v2783
        %v2785 = vrot.slane %v2771, %v2784
        %v2786 = vcombine.low %v728, %v750
        %v2787 = vcombine.high %v728, %v750
        %v2789 = vunpack.c.l.s4 1983009808
        %v2790 = vunpack.c.0.s8 %v2789
        %v2791 = vlaneseq
        %v2792 = vshrl.u32 %v2791, 7
        %v2793 = vsub.s32 %v2790, %v2792
        %v2794 = vrot.slane %v2786, %v2793
        %v2796 = vunpack.c.l.s4 1983009808
        %v2797 = vunpack.c.0.s8 %v2796
        %v2798 = vlaneseq
        %v2799 = vshrl.u32 %v2798, 7
        %v2800 = vsub.s32 %v2797, %v2799
        %v2801 = vrot.slane %v2787, %v2800
        %v2802 = vcombine.low %v739, %v761
        %v2803 = vcombine.high %v739, %v761
        %v2805 = vunpack.c.l.s4 1983009808
        %v2806 = vunpack.c.0.s8 %v2805
        %v2807 = vlaneseq
        %v2808 = vshrl.u32 %v2807, 7
        %v2809 = vsub.s32 %v2806, %v2808
        %v2810 = vrot.slane %v2802, %v2809
        %v2812 = vunpack.c.l.s4 1983009808
        %v2813 = vunpack.c.0.s8 %v2812
        %v2814 = vlaneseq
        %v2815 = vshrl.u32 %v2814, 7
        %v2816 = vsub.s32 %v2813, %v2815
        %v2817 = vrot.slane %v2803, %v2816
        %v2818 = vcombine.low %v2762, %v2778
        %v2819 = vcombine.high %v2762, %v2778
        %v2821 = vunpack.c.l.s4 1934713408
        %v2822 = vunpack.c.0.s8 %v2821
        %v2823 = vlaneseq
        %v2824 = vshrl.u32 %v2823, 7
        %v2825 = vsub.s32 %v2822, %v2824
        %v2826 = vrot.slane %v2818, %v2825
        %v2828 = vunpack.c.l.s4 1934713408
        %v2829 = vunpack.c.0.s8 %v2828
        %v2830 = vlaneseq
        %v2831 = vshrl.u32 %v2830, 7
        %v2832 = vsub.s32 %v2829, %v2831
        %v2833 = vrot.slane %v2819, %v2832
        %v2834 = vcombine.low %v2769, %v2785
        %v2835 = vcombine.high %v2769, %v2785
        %v2837 = vunpack.c.l.s4 1934713408
        %v2838 = vunpack.c.0.s8 %v2837
        %v2839 = vlaneseq
        %v2840 = vshrl.u32 %v2839, 7
        %v2841 = vsub.s32 %v2838, %v2840
        %v2842 = vrot.slane %v2834, %v2841
        %v2844 = vunpack.c.l.s4 1934713408
        %v2845 = vunpack.c.0.s8 %v2844
        %v2846 = vlaneseq
        %v2847 = vshrl.u32 %v2846, 7
        %v2848 = vsub.s32 %v2845, %v2847
        %v2849 = vrot.slane %v2835, %v2848
        %v2850 = vcombine.low %v2794, %v2810
        %v2851 = vcombine.high %v2794, %v2810
        %v2853 = vunpack.c.l.s4 1934713408
        %v2854 = vunpack.c.0.s8 %v2853
        %v2855 = vlaneseq
        %v2856 = vshrl.u32 %v2855, 7
        %v2857 = vsub.s32 %v2854, %v2856
        %v2858 = vrot.slane %v2850, %v2857
        %v2860 = vunpack.c.l.s4 1934713408
        %v2861 = vunpack.c.0.s8 %v2860
        %v2862 = vlaneseq
        %v2863 = vshrl.u32 %v2862, 7
        %v2864 = vsub.s32 %v2861, %v2863
        %v2865 = vrot.slane %v2851, %v2864
        %v2866 = vcombine.low %v2801, %v2817
        %v2867 = vcombine.high %v2801, %v2817
        %v2869 = vunpack.c.l.s4 1934713408
        %v2870 = vunpack.c.0.s8 %v2869
        %v2871 = vlaneseq
        %v2872 = vshrl.u32 %v2871, 7
        %v2873 = vsub.s32 %v2870, %v2872
        %v2874 = vrot.slane %v2866, %v2873
        %v2876 = vunpack.c.l.s4 1934713408
        %v2877 = vunpack.c.0.s8 %v2876
        %v2878 = vlaneseq
        %v2879 = vshrl.u32 %v2878, 7
        %v2880 = vsub.s32 %v2877, %v2879
        %v2881 = vrot.slane %v2867, %v2880
        %v2882 = vcombine.low %v2826, %v2858
        %v2883 = vcombine.high %v2826, %v2858
        %v2884 = vcombine.low %v2833, %v2865
        %v2885 = vcombine.high %v2833, %v2865
        %v2886 = vcombine.low %v2842, %v2874
        %v2887 = vcombine.high %v2842, %v2874
        %v2888 = vcombine.low %v2849, %v2881
        %v2889 = vcombine.high %v2849, %v2881
        %v2890 = vcombine.low %v772, %v794
        %v2891 = vcombine.high %v772, %v794
        %v2893 = vunpack.c.l.s4 1983009808
        %v2894 = vunpack.c.0.s8 %v2893
        %v2895 = vlaneseq
        %v2896 = vshrl.u32 %v2895, 7
        %v2897 = vsub.s32 %v2894, %v2896
        %v2898 = vrot.slane %v2890, %v2897
        %v2900 = vunpack.c.l.s4 1983009808
        %v2901 = vunpack.c.0.s8 %v2900
        %v2902 = vlaneseq
        %v2903 = vshrl.u32 %v2902, 7
        %v2904 = vsub.s32 %v2901, %v2903
        %v2905 = vrot.slane %v2891, %v2904
        %v2906 = vcombine.low %v783, %v805
        %v2907 = vcombine.high %v783, %v805
        %v2909 = vunpack.c.l.s4 1983009808
        %v2910 = vunpack.c.0.s8 %v2909
        %v2911 = vlaneseq
        %v2912 = vshrl.u32 %v2911, 7
        %v2913 = vsub.s32 %v2910, %v2912
        %v2914 = vrot.slane %v2906, %v2913
        %v2916 = vunpack.c.l.s4 1983009808
        %v2917 = vunpack.c.0.s8 %v2916
        %v2918 = vlaneseq
        %v2919 = vshrl.u32 %v2918, 7
        %v2920 = vsub.s32 %v2917, %v2919
        %v2921 = vrot.slane %v2907, %v2920
        %v2922 = vcombine.low %v816, %v838
        %v2923 = vcombine.high %v816, %v838
        %v2925 = vunpack.c.l.s4 1983009808
        %v2926 = vunpack.c.0.s8 %v2925
        %v2927 = vlaneseq
        %v2928 = vshrl.u32 %v2927, 7
        %v2929 = vsub.s32 %v2926, %v2928
        %v2930 = vrot.slane %v2922, %v2929
        %v2932 = vunpack.c.l.s4 1983009808
        %v2933 = vunpack.c.0.s8 %v2932
        %v2934 = vlaneseq
        %v2935 = vshrl.u32 %v2934, 7
        %v2936 = vsub.s32 %v2933, %v2935
        %v2937 = vrot.slane %v2923, %v2936
        %v2938 = vcombine.low %v827, %v849
        %v2939 = vcombine.high %v827, %v849
        %v2941 = vunpack.c.l.s4 1983009808
        %v2942 = vunpack.c.0.s8 %v2941
        %v2943 = vlaneseq
        %v2944 = vshrl.u32 %v2943, 7
        %v2945 = vsub.s32 %v2942, %v2944
        %v2946 = vrot.slane %v2938, %v2945
        %v2948 = vunpack.c.l.s4 1983009808
        %v2949 = vunpack.c.0.s8 %v2948
        %v2950 = vlaneseq
        %v2951 = vshrl.u32 %v2950, 7
        %v2952 = vsub.s32 %v2949, %v2951
        %v2953 = vrot.slane %v2939, %v2952
        %v2954 = vcombine.low %v2898, %v2914
        %v2955 = vcombine.high %v2898, %v2914
        %v2957 = vunpack.c.l.s4 1934713408
        %v2958 = vunpack.c.0.s8 %v2957
        %v2959 = vlaneseq
        %v2960 = vshrl.u32 %v2959, 7
        %v2961 = vsub.s32 %v2958, %v2960
        %v2962 = vrot.slane %v2954, %v2961
        %v2964 = vunpack.c.l.s4 1934713408
        %v2965 = vunpack.c.0.s8 %v2964
        %v2966 = vlaneseq
        %v2967 = vshrl.u32 %v2966, 7
        %v2968 = vsub.s32 %v2965, %v2967
        %v2969 = vrot.slane %v2955, %v2968
        %v2970 = vcombine.low %v2905, %v2921
        %v2971 = vcombine.high %v2905, %v2921
        %v2973 = vunpack.c.l.s4 1934713408
        %v2974 = vunpack.c.0.s8 %v2973
        %v2975 = vlaneseq
        %v2976 = vshrl.u32 %v2975, 7
        %v2977 = vsub.s32 %v2974, %v2976
        %v2978 = vrot.slane %v2970, %v2977
        %v2980 = vunpack.c.l.s4 1934713408
        %v2981 = vunpack.c.0.s8 %v2980
        %v2982 = vlaneseq
        %v2983 = vshrl.u32 %v2982, 7
        %v2984 = vsub.s32 %v2981, %v2983
        %v2985 = vrot.slane %v2971, %v2984
        %v2986 = vcombine.low %v2930, %v2946
        %v2987 = vcombine.high %v2930, %v2946
        %v2989 = vunpack.c.l.s4 1934713408
        %v2990 = vunpack.c.0.s8 %v2989
        %v2991 = vlaneseq
        %v2992 = vshrl.u32 %v2991, 7
        %v2993 = vsub.s32 %v2990, %v2992
        %v2994 = vrot.slane %v2986, %v2993
        %v2996 = vunpack.c.l.s4 1934713408
        %v2997 = vunpack.c.0.s8 %v2996
        %v2998 = vlaneseq
        %v2999 = vshrl.u32 %v2998, 7
        %v3000 = vsub.s32 %v2997, %v2999
        %v3001 = vrot.slane %v2987, %v3000
        %v3002 = vcombine.low %v2937, %v2953
        %v3003 = vcombine.high %v2937, %v2953
        %v3005 = vunpack.c.l.s4 1934713408
        %v3006 = vunpack.c.0.s8 %v3005
        %v3007 = vlaneseq
        %v3008 = vshrl.u32 %v3007, 7
        %v3009 = vsub.s32 %v3006, %v3008
        %v3010 = vrot.slane %v3002, %v3009
        %v3012 = vunpack.c.l.s4 1934713408
        %v3013 = vunpack.c.0.s8 %v3012
        %v3014 = vlaneseq
        %v3015 = vshrl.u32 %v3014, 7
        %v3016 = vsub.s32 %v3013, %v3015
        %v3017 = vrot.slane %v3003, %v3016
        %v3018 = vcombine.low %v2962, %v2994
        %v3019 = vcombine.high %v2962, %v2994
        %v3020 = vcombine.low %v2969, %v3001
        %v3021 = vcombine.high %v2969, %v3001
        %v3022 = vcombine.low %v2978, %v3010
        %v3023 = vcombine.high %v2978, %v3010
        %v3024 = vcombine.low %v2985, %v3017
        %v3025 = vcombine.high %v2985, %v3017
        %3034 = vrot.lane.b32.xlu0 %v979, 2
        %v3035 = vpop.permute.xlu0 %3034
        %3036 = vrot.lane.b32.xlu0 %v1115, 2
        %v3037 = vpop.permute.xlu0 %3036
        %3038 = vrot.lane.b32.xlu0 %v1523, 2
        %v3039 = vpop.permute.xlu0 %3038
        %3040 = vrot.lane.b32.xlu0 %v1659, 2
        %v3041 = vpop.permute.xlu0 %3040
        %3042 = vrot.lane.b32.xlu0 %v2067, 2
        %v3043 = vpop.permute.xlu0 %3042
        %3044 = vrot.lane.b32.xlu0 %v2203, 2
        %v3045 = vpop.permute.xlu0 %3044
        %3046 = vrot.lane.b32.xlu0 %v2611, 2
        %v3047 = vpop.permute.xlu0 %3046
        %3048 = vrot.lane.b32.xlu0 %v2747, 2
        %v3049 = vpop.permute.xlu0 %3048
        %3066 = vrot.lane.b32.xlu0 %v980, 4
        %v3067 = vpop.permute.xlu0 %3066
        %3068 = vrot.lane.b32.xlu0 %v1116, 4
        %v3069 = vpop.permute.xlu0 %3068
        %3070 = vrot.lane.b32.xlu0 %v1524, 4
        %v3071 = vpop.permute.xlu0 %3070
        %3072 = vrot.lane.b32.xlu0 %v1660, 4
        %v3073 = vpop.permute.xlu0 %3072
        %3074 = vrot.lane.b32.xlu0 %v2068, 4
        %v3075 = vpop.permute.xlu0 %3074
        %3076 = vrot.lane.b32.xlu0 %v2204, 4
        %v3077 = vpop.permute.xlu0 %3076
        %3078 = vrot.lane.b32.xlu0 %v2612, 4
        %v3079 = vpop.permute.xlu0 %3078
        %3080 = vrot.lane.b32.xlu0 %v2748, 4
        %v3081 = vpop.permute.xlu0 %3080
        %3098 = vrot.lane.b32.xlu0 %v981, 6
        %v3099 = vpop.permute.xlu0 %3098
        %3100 = vrot.lane.b32.xlu0 %v1117, 6
        %v3101 = vpop.permute.xlu0 %3100
        %3102 = vrot.lane.b32.xlu0 %v1525, 6
        %v3103 = vpop.permute.xlu0 %3102
        %3104 = vrot.lane.b32.xlu0 %v1661, 6
        %v3105 = vpop.permute.xlu0 %3104
        %3106 = vrot.lane.b32.xlu0 %v2069, 6
        %v3107 = vpop.permute.xlu0 %3106
        %3108 = vrot.lane.b32.xlu0 %v2205, 6
        %v3109 = vpop.permute.xlu0 %3108
        %3110 = vrot.lane.b32.xlu0 %v2613, 6
        %v3111 = vpop.permute.xlu0 %3110
        %3112 = vrot.lane.b32.xlu0 %v2749, 6
        %v3113 = vpop.permute.xlu0 %3112
        %3130 = vrot.lane.b32.xlu0 %v982, 8
        %v3131 = vpop.permute.xlu0 %3130
        %3132 = vrot.lane.b32.xlu0 %v1118, 8
        %v3133 = vpop.permute.xlu0 %3132
        %3134 = vrot.lane.b32.xlu0 %v1526, 8
        %v3135 = vpop.permute.xlu0 %3134
        %3136 = vrot.lane.b32.xlu0 %v1662, 8
        %v3137 = vpop.permute.xlu0 %3136
        %3138 = vrot.lane.b32.xlu0 %v2070, 8
        %v3139 = vpop.permute.xlu0 %3138
        %3140 = vrot.lane.b32.xlu0 %v2206, 8
        %v3141 = vpop.permute.xlu0 %3140
        %3142 = vrot.lane.b32.xlu0 %v2614, 8
        %v3143 = vpop.permute.xlu0 %3142
        %3144 = vrot.lane.b32.xlu0 %v2750, 8
        %v3145 = vpop.permute.xlu0 %3144
        %3162 = vrot.lane.b32.xlu0 %v983, 10
        %v3163 = vpop.permute.xlu0 %3162
        %3164 = vrot.lane.b32.xlu0 %v1119, 10
        %v3165 = vpop.permute.xlu0 %3164
        %3166 = vrot.lane.b32.xlu0 %v1527, 10
        %v3167 = vpop.permute.xlu0 %3166
        %3168 = vrot.lane.b32.xlu0 %v1663, 10
        %v3169 = vpop.permute.xlu0 %3168
        %3170 = vrot.lane.b32.xlu0 %v2071, 10
        %v3171 = vpop.permute.xlu0 %3170
        %3172 = vrot.lane.b32.xlu0 %v2207, 10
        %v3173 = vpop.permute.xlu0 %3172
        %3174 = vrot.lane.b32.xlu0 %v2615, 10
        %v3175 = vpop.permute.xlu0 %3174
        %3176 = vrot.lane.b32.xlu0 %v2751, 10
        %v3177 = vpop.permute.xlu0 %3176
        %3194 = vrot.lane.b32.xlu0 %v984, 12
        %v3195 = vpop.permute.xlu0 %3194
        %3196 = vrot.lane.b32.xlu0 %v1120, 12
        %v3197 = vpop.permute.xlu0 %3196
        %3198 = vrot.lane.b32.xlu0 %v1528, 12
        %v3199 = vpop.permute.xlu0 %3198
        %3200 = vrot.lane.b32.xlu0 %v1664, 12
        %v3201 = vpop.permute.xlu0 %3200
        %3202 = vrot.lane.b32.xlu0 %v2072, 12
        %v3203 = vpop.permute.xlu0 %3202
        %3204 = vrot.lane.b32.xlu0 %v2208, 12
        %v3205 = vpop.permute.xlu0 %3204
        %3206 = vrot.lane.b32.xlu0 %v2616, 12
        %v3207 = vpop.permute.xlu0 %3206
        %3208 = vrot.lane.b32.xlu0 %v2752, 12
        %v3209 = vpop.permute.xlu0 %3208
        %3226 = vrot.lane.b32.xlu0 %v985, 14
        %v3227 = vpop.permute.xlu0 %3226
        %3228 = vrot.lane.b32.xlu0 %v1121, 14
        %v3229 = vpop.permute.xlu0 %3228
        %3230 = vrot.lane.b32.xlu0 %v1529, 14
        %v3231 = vpop.permute.xlu0 %3230
        %3232 = vrot.lane.b32.xlu0 %v1665, 14
        %v3233 = vpop.permute.xlu0 %3232
        %3234 = vrot.lane.b32.xlu0 %v2073, 14
        %v3235 = vpop.permute.xlu0 %3234
        %3236 = vrot.lane.b32.xlu0 %v2209, 14
        %v3237 = vpop.permute.xlu0 %3236
        %3238 = vrot.lane.b32.xlu0 %v2617, 14
        %v3239 = vpop.permute.xlu0 %3238
        %3240 = vrot.lane.b32.xlu0 %v2753, 14
        %v3241 = vpop.permute.xlu0 %3240
        %3258 = vrot.lane.b32.xlu0 %v1250, 16
        %v3259 = vpop.permute.xlu0 %3258
        %3260 = vrot.lane.b32.xlu0 %v1386, 16
        %v3261 = vpop.permute.xlu0 %3260
        %3262 = vrot.lane.b32.xlu0 %v1794, 16
        %v3263 = vpop.permute.xlu0 %3262
        %3264 = vrot.lane.b32.xlu0 %v1930, 16
        %v3265 = vpop.permute.xlu0 %3264
        %3266 = vrot.lane.b32.xlu0 %v2338, 16
        %v3267 = vpop.permute.xlu0 %3266
        %3268 = vrot.lane.b32.xlu0 %v2474, 16
        %v3269 = vpop.permute.xlu0 %3268
        %3270 = vrot.lane.b32.xlu0 %v2882, 16
        %v3271 = vpop.permute.xlu0 %3270
        %3272 = vrot.lane.b32.xlu0 %v3018, 16
        %v3273 = vpop.permute.xlu0 %3272
        %3290 = vrot.lane.b32.xlu0 %v1251, 18
        %v3291 = vpop.permute.xlu0 %3290
        %3292 = vrot.lane.b32.xlu0 %v1387, 18
        %v3293 = vpop.permute.xlu0 %3292
        %3294 = vrot.lane.b32.xlu0 %v1795, 18
        %v3295 = vpop.permute.xlu0 %3294
        %3296 = vrot.lane.b32.xlu0 %v1931, 18
        %v3297 = vpop.permute.xlu0 %3296
        %3298 = vrot.lane.b32.xlu0 %v2339, 18
        %v3299 = vpop.permute.xlu0 %3298
        %3300 = vrot.lane.b32.xlu0 %v2475, 18
        %v3301 = vpop.permute.xlu0 %3300
        %3302 = vrot.lane.b32.xlu0 %v2883, 18
        %v3303 = vpop.permute.xlu0 %3302
        %3304 = vrot.lane.b32.xlu0 %v3019, 18
        %v3305 = vpop.permute.xlu0 %3304
        %3322 = vrot.lane.b32.xlu0 %v1252, 20
        %v3323 = vpop.permute.xlu0 %3322
        %3324 = vrot.lane.b32.xlu0 %v1388, 20
        %v3325 = vpop.permute.xlu0 %3324
        %3326 = vrot.lane.b32.xlu0 %v1796, 20
        %v3327 = vpop.permute.xlu0 %3326
        %3328 = vrot.lane.b32.xlu0 %v1932, 20
        %v3329 = vpop.permute.xlu0 %3328
        %3330 = vrot.lane.b32.xlu0 %v2340, 20
        %v3331 = vpop.permute.xlu0 %3330
        %3332 = vrot.lane.b32.xlu0 %v2476, 20
        %v3333 = vpop.permute.xlu0 %3332
        %3334 = vrot.lane.b32.xlu0 %v2884, 20
        %v3335 = vpop.permute.xlu0 %3334
        %3336 = vrot.lane.b32.xlu0 %v3020, 20
        %v3337 = vpop.permute.xlu0 %3336
        %3354 = vrot.lane.b32.xlu0 %v1253, 22
        %v3355 = vpop.permute.xlu0 %3354
        %3356 = vrot.lane.b32.xlu0 %v1389, 22
        %v3357 = vpop.permute.xlu0 %3356
        %3358 = vrot.lane.b32.xlu0 %v1797, 22
        %v3359 = vpop.permute.xlu0 %3358
        %3360 = vrot.lane.b32.xlu0 %v1933, 22
        %v3361 = vpop.permute.xlu0 %3360
        %3362 = vrot.lane.b32.xlu0 %v2341, 22
        %v3363 = vpop.permute.xlu0 %3362
        %3364 = vrot.lane.b32.xlu0 %v2477, 22
        %v3365 = vpop.permute.xlu0 %3364
        %3366 = vrot.lane.b32.xlu0 %v2885, 22
        %v3367 = vpop.permute.xlu0 %3366
        %3368 = vrot.lane.b32.xlu0 %v3021, 22
        %v3369 = vpop.permute.xlu0 %3368
        %3386 = vrot.lane.b32.xlu0 %v1254, 24
        %v3387 = vpop.permute.xlu0 %3386
        %3388 = vrot.lane.b32.xlu0 %v1390, 24
        %v3389 = vpop.permute.xlu0 %3388
        %3390 = vrot.lane.b32.xlu0 %v1798, 24
        %v3391 = vpop.permute.xlu0 %3390
        %3392 = vrot.lane.b32.xlu0 %v1934, 24
        %v3393 = vpop.permute.xlu0 %3392
        %3394 = vrot.lane.b32.xlu0 %v2342, 24
        %v3395 = vpop.permute.xlu0 %3394
        %3396 = vrot.lane.b32.xlu0 %v2478, 24
        %v3397 = vpop.permute.xlu0 %3396
        %3398 = vrot.lane.b32.xlu0 %v2886, 24
        %v3399 = vpop.permute.xlu0 %3398
        %3400 = vrot.lane.b32.xlu0 %v3022, 24
        %v3401 = vpop.permute.xlu0 %3400
        %3418 = vrot.lane.b32.xlu0 %v1255, 26
        %v3419 = vpop.permute.xlu0 %3418
        %3420 = vrot.lane.b32.xlu0 %v1391, 26
        %v3421 = vpop.permute.xlu0 %3420
        %3422 = vrot.lane.b32.xlu0 %v1799, 26
        %v3423 = vpop.permute.xlu0 %3422
        %3424 = vrot.lane.b32.xlu0 %v1935, 26
        %v3425 = vpop.permute.xlu0 %3424
        %3426 = vrot.lane.b32.xlu0 %v2343, 26
        %v3427 = vpop.permute.xlu0 %3426
        %3428 = vrot.lane.b32.xlu0 %v2479, 26
        %v3429 = vpop.permute.xlu0 %3428
        %3430 = vrot.lane.b32.xlu0 %v2887, 26
        %v3431 = vpop.permute.xlu0 %3430
        %3432 = vrot.lane.b32.xlu0 %v3023, 26
        %v3433 = vpop.permute.xlu0 %3432
        %3450 = vrot.lane.b32.xlu0 %v1256, 28
        %v3451 = vpop.permute.xlu0 %3450
        %3452 = vrot.lane.b32.xlu0 %v1392, 28
        %v3453 = vpop.permute.xlu0 %3452
        %3454 = vrot.lane.b32.xlu0 %v1800, 28
        %v3455 = vpop.permute.xlu0 %3454
        %3456 = vrot.lane.b32.xlu0 %v1936, 28
        %v3457 = vpop.permute.xlu0 %3456
        %3458 = vrot.lane.b32.xlu0 %v2344, 28
        %v3459 = vpop.permute.xlu0 %3458
        %3460 = vrot.lane.b32.xlu0 %v2480, 28
        %v3461 = vpop.permute.xlu0 %3460
        %3462 = vrot.lane.b32.xlu0 %v2888, 28
        %v3463 = vpop.permute.xlu0 %3462
        %3464 = vrot.lane.b32.xlu0 %v3024, 28
        %v3465 = vpop.permute.xlu0 %3464
        %3482 = vrot.lane.b32.xlu0 %v1257, 30
        %v3483 = vpop.permute.xlu0 %3482
        %3484 = vrot.lane.b32.xlu0 %v1393, 30
        %v3485 = vpop.permute.xlu0 %3484
        %3486 = vrot.lane.b32.xlu0 %v1801, 30
        %v3487 = vpop.permute.xlu0 %3486
        %3488 = vrot.lane.b32.xlu0 %v1937, 30
        %v3489 = vpop.permute.xlu0 %3488
        %3490 = vrot.lane.b32.xlu0 %v2345, 30
        %v3491 = vpop.permute.xlu0 %3490
        %3492 = vrot.lane.b32.xlu0 %v2481, 30
        %v3493 = vpop.permute.xlu0 %3492
        %3494 = vrot.lane.b32.xlu0 %v2889, 30
        %v3495 = vpop.permute.xlu0 %3494
        %3496 = vrot.lane.b32.xlu0 %v3025, 30
        %v3497 = vpop.permute.xlu0 %3496
        %vm3506 = vcmask 15360
        %v3507 = vsel %vm3506, %v978, %v3035
        %v3508 = vsel %vm3506, %v1114, %v3037
        %v3509 = vsel %vm3506, %v1522, %v3039
        %v3510 = vsel %vm3506, %v1658, %v3041
        %v3511 = vsel %vm3506, %v2066, %v3043
        %v3512 = vsel %vm3506, %v2202, %v3045
        %v3513 = vsel %vm3506, %v2610, %v3047
        %v3514 = vsel %vm3506, %v2746, %v3049
        %vm3515 = vcmask 31744
        %v3516 = vsel %vm3515, %v3507, %v3067
        %v3517 = vsel %vm3515, %v3508, %v3069
        %v3518 = vsel %vm3515, %v3509, %v3071
        %v3519 = vsel %vm3515, %v3510, %v3073
        %v3520 = vsel %vm3515, %v3511, %v3075
        %v3521 = vsel %vm3515, %v3512, %v3077
        %v3522 = vsel %vm3515, %v3513, %v3079
        %v3523 = vsel %vm3515, %v3514, %v3081
        %vm3524 = vcmask 48128
        %v3525 = vsel %vm3524, %v3516, %v3099
        %v3526 = vsel %vm3524, %v3517, %v3101
        %v3527 = vsel %vm3524, %v3518, %v3103
        %v3528 = vsel %vm3524, %v3519, %v3105
        %v3529 = vsel %vm3524, %v3520, %v3107
        %v3530 = vsel %vm3524, %v3521, %v3109
        %v3531 = vsel %vm3524, %v3522, %v3111
        %v3532 = vsel %vm3524, %v3523, %v3113
        %vm3533 = vcmask 64512
        %v3534 = vsel %vm3533, %v3525, %v3131
        %v3535 = vsel %vm3533, %v3526, %v3133
        %v3536 = vsel %vm3533, %v3527, %v3135
        %v3537 = vsel %vm3533, %v3528, %v3137
        %v3538 = vsel %vm3533, %v3529, %v3139
        %v3539 = vsel %vm3533, %v3530, %v3141
        %v3540 = vsel %vm3533, %v3531, %v3143
        %v3541 = vsel %vm3533, %v3532, %v3145
        %vm3542 = vcmask 80896
        %v3543 = vsel %vm3542, %v3534, %v3163
        %v3544 = vsel %vm3542, %v3535, %v3165
        %v3545 = vsel %vm3542, %v3536, %v3167
        %v3546 = vsel %vm3542, %v3537, %v3169
        %v3547 = vsel %vm3542, %v3538, %v3171
        %v3548 = vsel %vm3542, %v3539, %v3173
        %v3549 = vsel %vm3542, %v3540, %v3175
        %v3550 = vsel %vm3542, %v3541, %v3177
        %vm3551 = vcmask 97280
        %v3552 = vsel %vm3551, %v3543, %v3195
        %v3553 = vsel %vm3551, %v3544, %v3197
        %v3554 = vsel %vm3551, %v3545, %v3199
        %v3555 = vsel %vm3551, %v3546, %v3201
        %v3556 = vsel %vm3551, %v3547, %v3203
        %v3557 = vsel %vm3551, %v3548, %v3205
        %v3558 = vsel %vm3551, %v3549, %v3207
        %v3559 = vsel %vm3551, %v3550, %v3209
        %vm3560 = vcmask 113664
        %v3561 = vsel %vm3560, %v3552, %v3227
        %v3562 = vsel %vm3560, %v3553, %v3229
        %v3563 = vsel %vm3560, %v3554, %v3231
        %v3564 = vsel %vm3560, %v3555, %v3233
        %v3565 = vsel %vm3560, %v3556, %v3235
        %v3566 = vsel %vm3560, %v3557, %v3237
        %v3567 = vsel %vm3560, %v3558, %v3239
        %v3568 = vsel %vm3560, %v3559, %v3241
        %vm3569 = vcmask 130048
        %v3570 = vsel %vm3569, %v3561, %v3259
        %v3571 = vsel %vm3569, %v3562, %v3261
        %v3572 = vsel %vm3569, %v3563, %v3263
        %v3573 = vsel %vm3569, %v3564, %v3265
        %v3574 = vsel %vm3569, %v3565, %v3267
        %v3575 = vsel %vm3569, %v3566, %v3269
        %v3576 = vsel %vm3569, %v3567, %v3271
        %v3577 = vsel %vm3569, %v3568, %v3273
        %vm3578 = vcmask 146432
        %v3579 = vsel %vm3578, %v3570, %v3291
        %v3580 = vsel %vm3578, %v3571, %v3293
        %v3581 = vsel %vm3578, %v3572, %v3295
        %v3582 = vsel %vm3578, %v3573, %v3297
        %v3583 = vsel %vm3578, %v3574, %v3299
        %v3584 = vsel %vm3578, %v3575, %v3301
        %v3585 = vsel %vm3578, %v3576, %v3303
        %v3586 = vsel %vm3578, %v3577, %v3305
        %vm3587 = vcmask 162816
        %v3588 = vsel %vm3587, %v3579, %v3323
        %v3589 = vsel %vm3587, %v3580, %v3325
        %v3590 = vsel %vm3587, %v3581, %v3327
        %v3591 = vsel %vm3587, %v3582, %v3329
        %v3592 = vsel %vm3587, %v3583, %v3331
        %v3593 = vsel %vm3587, %v3584, %v3333
        %v3594 = vsel %vm3587, %v3585, %v3335
        %v3595 = vsel %vm3587, %v3586, %v3337
        %vm3596 = vcmask 179200
        %v3597 = vsel %vm3596, %v3588, %v3355
        %v3598 = vsel %vm3596, %v3589, %v3357
        %v3599 = vsel %vm3596, %v3590, %v3359
        %v3600 = vsel %vm3596, %v3591, %v3361
        %v3601 = vsel %vm3596, %v3592, %v3363
        %v3602 = vsel %vm3596, %v3593, %v3365
        %v3603 = vsel %vm3596, %v3594, %v3367
        %v3604 = vsel %vm3596, %v3595, %v3369
        %vm3605 = vcmask 195584
        %v3606 = vsel %vm3605, %v3597, %v3387
        %v3607 = vsel %vm3605, %v3598, %v3389
        %v3608 = vsel %vm3605, %v3599, %v3391
        %v3609 = vsel %vm3605, %v3600, %v3393
        %v3610 = vsel %vm3605, %v3601, %v3395
        %v3611 = vsel %vm3605, %v3602, %v3397
        %v3612 = vsel %vm3605, %v3603, %v3399
        %v3613 = vsel %vm3605, %v3604, %v3401
        %vm3614 = vcmask 211968
        %v3615 = vsel %vm3614, %v3606, %v3419
        %v3616 = vsel %vm3614, %v3607, %v3421
        %v3617 = vsel %vm3614, %v3608, %v3423
        %v3618 = vsel %vm3614, %v3609, %v3425
        %v3619 = vsel %vm3614, %v3610, %v3427
        %v3620 = vsel %vm3614, %v3611, %v3429
        %v3621 = vsel %vm3614, %v3612, %v3431
        %v3622 = vsel %vm3614, %v3613, %v3433
        %vm3623 = vcmask 228352
        %v3624 = vsel %vm3623, %v3615, %v3451
        %v3625 = vsel %vm3623, %v3616, %v3453
        %v3626 = vsel %vm3623, %v3617, %v3455
        %v3627 = vsel %vm3623, %v3618, %v3457
        %v3628 = vsel %vm3623, %v3619, %v3459
        %v3629 = vsel %vm3623, %v3620, %v3461
        %v3630 = vsel %vm3623, %v3621, %v3463
        %v3631 = vsel %vm3623, %v3622, %v3465
        %vm3632 = vcmask 244736
        %v3633 = vsel %vm3632, %v3624, %v3483
        %v3634 = vsel %vm3632, %v3625, %v3485
        %v3635 = vsel %vm3632, %v3626, %v3487
        %v3636 = vsel %vm3632, %v3627, %v3489
        %v3637 = vsel %vm3632, %v3628, %v3491
        %v3638 = vsel %vm3632, %v3629, %v3493
        %v3639 = vsel %vm3632, %v3630, %v3495
        %v3640 = vsel %vm3632, %v3631, %v3497
        %vm3641 = vcmask 261120
        %3642 = vst.msk [vmem:[%s135] sm:$0xff] %vm3641, %v3633
        %3643 = vst.msk [vmem:[%s135 + $0x8] sm:$0xff] %vm3641, %v3634
        %3644 = vst.msk [vmem:[%s135 + $0x10] sm:$0xff] %vm3641, %v3635
        %3645 = vst.msk [vmem:[%s135 + $0x18] sm:$0xff] %vm3641, %v3636
        %3646 = vst.msk [vmem:[%s135 + $0x20] sm:$0xff] %vm3641, %v3637
        %3647 = vst.msk [vmem:[%s135 + $0x28] sm:$0xff] %vm3641, %v3638
        %3648 = vst.msk [vmem:[%s135 + $0x30] sm:$0xff] %vm3641, %v3639
        %3649 = vst.msk [vmem:[%s135 + $0x38] sm:$0xff] %vm3641, %v3640
        %3658 = vrot.lane.b32.xlu0 %v3633, 32
        %v3659 = vpop.permute.xlu0 %3658
        %3660 = vrot.lane.b32.xlu0 %v3634, 32
        %v3661 = vpop.permute.xlu0 %3660
        %3662 = vrot.lane.b32.xlu0 %v3635, 32
        %v3663 = vpop.permute.xlu0 %3662
        %3664 = vrot.lane.b32.xlu0 %v3636, 32
        %v3665 = vpop.permute.xlu0 %3664
        %3666 = vrot.lane.b32.xlu0 %v3637, 32
        %v3667 = vpop.permute.xlu0 %3666
        %3668 = vrot.lane.b32.xlu0 %v3638, 32
        %v3669 = vpop.permute.xlu0 %3668
        %3670 = vrot.lane.b32.xlu0 %v3639, 32
        %v3671 = vpop.permute.xlu0 %3670
        %3672 = vrot.lane.b32.xlu0 %v3640, 32
        %v3673 = vpop.permute.xlu0 %3672
        %vm3682 = vcmask 523520
        %3683 = vst.msk [vmem:[%s135] sm:$0xff] %vm3682, %v3659
        %3684 = vst.msk [vmem:[%s135 + $0x8] sm:$0xff] %vm3682, %v3661
        %3685 = vst.msk [vmem:[%s135 + $0x10] sm:$0xff] %vm3682, %v3663
        %3686 = vst.msk [vmem:[%s135 + $0x18] sm:$0xff] %vm3682, %v3665
        %3687 = vst.msk [vmem:[%s135 + $0x20] sm:$0xff] %vm3682, %v3667
        %3688 = vst.msk [vmem:[%s135 + $0x28] sm:$0xff] %vm3682, %v3669
        %3689 = vst.msk [vmem:[%s135 + $0x30] sm:$0xff] %vm3682, %v3671
        %3690 = vst.msk [vmem:[%s135 + $0x38] sm:$0xff] %vm3682, %v3673
        %s3691 = sand.u32 %s52, 1
        %s3692 = scalar_lea.sflag [#allocation4], %s3691
        %s3693 = sand.u32 %s52, 1
        %s3694 = smul.addr %s3693, 64
        %s3695 = scalar_lea.vmem [#allocation5], %s3694
        // Predicated region
        $region29: #{tpu_custom_call.1} parent=23 // pred_check
          %p3696 = pneg %p62
        $region30: #{tpu_custom_call.1} parent=23 // pred_check_branch
          %3698 = sbr.rel (%p3696) target = $region32
        $region31: #{tpu_custom_call.1} parent=23 // pred_region
          %s3699 = smul.u32 4, %s18
          %s3701 = ssub.s32 1024, 1024
          %3702 = vsyncadd %s3692, %s3701
          %s3703 = smul.addr %s3699, 2
          %s3704 = smul.addr %s3703, 128
          %s3705 = scalar_lea.hbm %s1, %s3704
          %s3706 = sshll.u32 %s3695, 4
          %s3707 = int_to_ptr.vmem [resolvable:$true] %s3706
          %3712 = dma.vmem_to_hbm [thread:$0]  %s3707, 1024, %s3705, %s3692, 128, 128, 8
        $region32: #{tpu_custom_call.1} parent=23 // pred_fallthru
          _
      $region24: #{tpu_custom_call.1} parent=5 // pred_fallthru
        _
      %p3713 = scmp.le.s32.totalorder 2, %s13
      // Predicated region
      $region33: #{tpu_custom_call.1} parent=5 // pred_check
        %p3714 = pneg %p3713
      $region34: #{tpu_custom_call.1} parent=5 // pred_check_branch
        %3716 = sbr.rel (%p3714) target = $region36
      $region35: #{tpu_custom_call.1} parent=5 // pred_region
        %s3717 = ssub.s32 %s13, 2
        // Predicated region
        $region37: #{tpu_custom_call.1} parent=35 // pred_check
          %p3718 = pneg %p68
        $region38: #{tpu_custom_call.1} parent=35 // pred_check_branch
          %3720 = sbr.rel (%p3718) target = $region40
        $region39: #{tpu_custom_call.1} parent=35 // pred_region
          %s3721 = sand.u32 %s53, 1
          %s3722 = scalar_lea.sflag [#allocation4], %s3721
          %s3723 = sand.u32 %s53, 1
          %s3724 = smul.addr %s3723, 64
          %s3725 = scalar_lea.vmem [#allocation5], %s3724
          %3726 = dma.done %s3722, 1024
        $region40: #{tpu_custom_call.1} parent=35 // pred_fallthru
          _
      $region36: #{tpu_custom_call.1} parent=5 // pred_fallthru
        _
    $region6: #{tpu_custom_call.1} parent=1 // loop_footer
      %s17 = sadd.s32 1, %s13
    $region7: #{tpu_custom_call.1} parent=1 // loop_footer_branch
      %12 = sbr.rel target = $region3
    $region8: #{tpu_custom_call.1} parent=1 // loop_exit
      _
    %3727 = vsyncpa [#allocation3], 1
    %s3728 = scalar_lea.sflag [#allocation3], 1
    %3729 = vsyncpa %s3728, 1
    %3730 = vsyncpa [#allocation4], 1
    %s3731 = scalar_lea.sflag [#allocation4], 1
    %3732 = vsyncpa %s3731, 1

</llo_original>
